<compile_context>
chip_gen: v6e
topology: v6e:2x2x1
jax: 0.10.0
libtpu: 0.0.40
codegen_flags: <defaults>
</compile_context>

<pallas_src>
import jax
import jax.numpy as jnp
from jax.experimental import pallas as pl
from jax.experimental.pallas import tpu as pltpu

NUM_AGENTS = 3
B = 8                   # n_rollout_threads
D = 32                  # per-agent cent-obs dim (trans_hidden + trans_hidden)
H = 32                  # hidden_size
G = NUM_AGENTS * H      # 96  : agent-concatenated hidden width
GD = NUM_AGENTS * D     # 96  : agent-concatenated obs width
OUT_W = 128             # lane-dense packed output width
V_W = OUT_W - G         # 32  : lanes holding per-agent values (+ zero pad)
EPS = 1e-5              # nn.LayerNorm default eps

# Rows of the packed bias/gain slab (shape (17, G)).
(R_FNG, R_FNB, R_B1, R_LN1G, R_LN1B, R_BH, R_LNHG, R_LNHB,
 R_BIR, R_BIZ, R_BIN, R_BHR, R_BHZ, R_BHN, R_RNG, R_RNB, R_BV) = range(17)


# --------------------------------------------------------------------------
# Kernel
# --------------------------------------------------------------------------
def critic_all_kernel(obs_ref, rnn_ref, mask_ref,
                      w1_ref, wh_ref, wi_ref, whg_ref, wv_ref, vec_ref,
                      out_ref):
    f32 = jnp.float32
    V = vec_ref[...]                          # (17, G) packed biases / LN params
    row = lambda i: V[i:i + 1, :]             # (1, G)

    def seg_layernorm(x, g, b, seg):
        """LayerNorm applied independently to each `seg`-wide per-agent segment.
        Exact f32 VPU/XLU math (no MXU rounding)."""
        n = x.shape[-1] // seg
        parts = []
        for a in range(n):
            xa = x[:, a * seg:(a + 1) * seg]
            mu = jnp.mean(xa, axis=-1, keepdims=True)
            xc = xa - mu
            var = jnp.mean(xc * xc, axis=-1, keepdims=True)
            parts.append(xc * jax.lax.rsqrt(var + EPS))
        return jnp.concatenate(parts, axis=-1) * g + b

    def mm(a, w):
        return jnp.dot(a, w, preferred_element_type=f32)

    x = obs_ref[...]                          # (B, GD)
    h0 = rnn_ref[...] * mask_ref[...]         # (B, G) masked hidden state

    # ---- MLPBase: feature LayerNorm + fc1 + fc_h (layer_N=1), block-diag over agents ----
    x = seg_layernorm(x, row(R_FNG), row(R_FNB), D)
    x = jnp.maximum(mm(x, w1_ref[...]) + row(R_B1), 0.0)
    x = seg_layernorm(x, row(R_LN1G), row(R_LN1B), H)
    x = jnp.maximum(mm(x, wh_ref[...]) + row(R_BH), 0.0)
    x = seg_layernorm(x, row(R_LNHG), row(R_LNHB), H)

    # ---- RNNLayer: single-step GRU, all agents + all 3 gates fused into 2 matmuls ----
    xi = mm(x, wi_ref[...])                   # (B, 3G)
    hh = mm(h0, whg_ref[...])                 # (B, 3G)
    r = jax.nn.sigmoid(xi[:, 0:G] + row(R_BIR) + hh[:, 0:G] + row(R_BHR))
    z = jax.nn.sigmoid(xi[:, G:2 * G] + row(R_BIZ) + hh[:, G:2 * G] + row(R_BHZ))
    n = jnp.tanh(xi[:, 2 * G:3 * G] + row(R_BIN)
                 + r * (hh[:, 2 * G:3 * G] + row(R_BHN)))
    h1 = (1.0 - z) * n + z * h0               # (B, G) new hidden state

    # ---- RNNLayer output LayerNorm + per-agent v_out Linear(H, 1) ----
    feat = seg_layernorm(h1, row(R_RNG), row(R_RNB), H)
    vals = mm(feat, wv_ref[...]) + V[R_BV:R_BV + 1, :V_W]      # (B, 32), values in lanes 0:A

    # Lane-dense (B, 128) output: [ h1 | values / zero pad ].
    out_ref[:, :G] = h1
    out_ref[:, G:] = vals


# --------------------------------------------------------------------------
# Parameters
# --------------------------------------------------------------------------
def make_params(key):
    """Deterministic per-agent parameters, stacked with a leading num_agents axis."""
    def scaled(k, shape, scale=0.1):
        return scale * jax.random.normal(k, shape, dtype=jnp.float32)

    agent_keys = jax.random.split(key, NUM_AGENTS)
    per_agent = []
    for ak in agent_keys:
        ks = iter(jax.random.split(ak, 16))
        p = dict(
            fng=jnp.ones((1, D), jnp.float32), fnb=jnp.zeros((1, D), jnp.float32),
            w1=scaled(next(ks), (D, H)), b1=jnp.zeros((1, H), jnp.float32),
            ln1g=jnp.ones((1, H), jnp.float32), ln1b=jnp.zeros((1, H), jnp.float32),
            wh=scaled(next(ks), (H, H)), bh=jnp.zeros((1, H), jnp.float32),
            lnhg=jnp.ones((1, H), jnp.float32), lnhb=jnp.zeros((1, H), jnp.float32),
            wir=scaled(next(ks), (H, H)), wiz=scaled(next(ks), (H, H)), win=scaled(next(ks), (H, H)),
            whr=scaled(next(ks), (H, H)), whz=scaled(next(ks), (H, H)), whn=scaled(next(ks), (H, H)),
            bir=scaled(next(ks), (1, H), 0.01), biz=scaled(next(ks), (1, H), 0.01),
            bin=scaled(next(ks), (1, H), 0.01), bhr=scaled(next(ks), (1, H), 0.01),
            bhz=scaled(next(ks), (1, H), 0.01), bhn=scaled(next(ks), (1, H), 0.01),
            rng=jnp.ones((1, H), jnp.float32), rnb=jnp.zeros((1, H), jnp.float32),
            wv=scaled(next(ks), (H, 1)), bv=jnp.zeros((1, 1), jnp.float32),
        )
        per_agent.append(p)
    return {k: jnp.stack([p[k] for p in per_agent], axis=0) for k in per_agent[0]}


def pack_params(params):
    """Pack per-agent params into block-diagonal / fused slabs (host-side, once)."""
    A = NUM_AGENTS

    def block_diag(w):                          # (A, din, dout) -> (A*din, A*dout)
        din, dout = w.shape[1], w.shape[2]
        out = jnp.zeros((A * din, A * dout), jnp.float32)
        for a in range(A):
            out = out.at[a * din:(a + 1) * din, a * dout:(a + 1) * dout].set(w[a])
        return out

    w1 = block_diag(params["w1"])               # (GD, G)
    wh = block_diag(params["wh"])               # (G, G)

    # Fused GRU weights, gate-major columns: gate g, agent a -> cols [g*G + a*H, ...)
    wi = jnp.zeros((G, 3 * G), jnp.float32)
    whg = jnp.zeros((G, 3 * G), jnp.float32)
    for g_idx, (ki, kh) in enumerate((("wir", "whr"), ("wiz", "whz"), ("win", "whn"))):
        for a in range(A):
            c0 = g_idx * G + a * H
            wi = wi.at[a * H:(a + 1) * H, c0:c0 + H].set(params[ki][a])
            whg = whg.at[a * H:(a + 1) * H, c0:c0 + H].set(params[kh][a])

    # Block "diagonal" value head, padded to the 32 value lanes of the output slab.
    wv = jnp.zeros((G, V_W), jnp.float32)
    for a in range(A):
        wv = wv.at[a * H:(a + 1) * H, a].set(params["wv"][a][:, 0])

    def cat(k):                                 # (A, 1, H) -> (A*H,) agent-concatenated
        return params[k].reshape(-1)

    rows = [cat(k) for k in ("fng", "fnb", "b1", "ln1g", "ln1b", "bh", "lnhg", "lnhb",
                             "bir", "biz", "bin", "bhr", "bhz", "bhn", "rng", "rnb")]
    rows.append(jnp.zeros((G,), jnp.float32).at[:A].set(params["bv"][:, 0, 0]))
    vec = jnp.stack(rows, axis=0)               # (17, G)
    return w1, wh, wi, whg, wv, vec


# --------------------------------------------------------------------------
# Forward wrapper (single grid-less pallas_call, whole ensemble VMEM-resident)
# --------------------------------------------------------------------------
def r_critic_all_forward(packed, cent_obs, rnn_states, masks):
    """cent_obs: (B*A, D), rnn_states: (B*A, 1, H), masks: (B*A, 1).
    Returns (values (A*B, 1), rnn_states (A*B, 1, H)) in torch.vstack (agent-major) order."""
    w1, wh, wi, whg, wv, vec = packed

    # Layout plumbing only (mirrors the np.split reshaping of the original wrapper):
    obs_all = cent_obs.reshape(B, GD)                                   # (B, A*D)
    rnn_all = rnn_states.reshape(B, G)                                  # (B, A*H)
    mask_all = jnp.repeat(masks.reshape(B, NUM_AGENTS), H, axis=1)      # (B, A*H)

    inputs = (obs_all, rnn_all, mask_all, w1, wh, wi, whg, wv, vec)
    vmem = pl.BlockSpec(memory_space=pltpu.MemorySpace.VMEM)            # whole array in VMEM

    out = pl.pallas_call(
        critic_all_kernel,
        out_shape=jax.ShapeDtypeStruct((B, OUT_W), jnp.float32),
        in_specs=[vmem] * len(inputs),
        out_specs=vmem,
    )(*inputs)

    # Unpack the (B, 128) slab and reorder to torch.vstack (agent-major) layout.
    h_new = (out[:, :G].reshape(B, NUM_AGENTS, H)
             .transpose(1, 0, 2).reshape(NUM_AGENTS * B, 1, H))
    values = out[:, G:G + NUM_AGENTS].T.reshape(NUM_AGENTS * B, 1)
    return values, h_new


# --------------------------------------------------------------------------
# Pure-JAX reference (independent per-agent math, f32-accurate matmuls)
# --------------------------------------------------------------------------
def reference_forward(params, cent_obs, rnn_states, masks):
    hi = jax.lax.Precision.HIGHEST
    dot = lambda a, b: jnp.dot(a, b, precision=hi)

    obs_a = cent_obs.reshape(B, NUM_AGENTS, D).transpose(1, 0, 2)                    # (A, B, D)
    rnn_a = rnn_states.reshape(B, NUM_AGENTS, 1, H)[:, :, 0, :].transpose(1, 0, 2)   # (A, B, H)
    mask_a = masks.reshape(B, NUM_AGENTS, 1).transpose(1, 0, 2)                      # (A, B, 1)

    def ln(x, g, b):
        mu = x.mean(-1, keepdims=True)
        var = ((x - mu) ** 2).mean(-1, keepdims=True)
        return (x - mu) / jnp.sqrt(var + EPS) * g + b

    def one_agent(p, x, h, m):
        h0 = h * m
        x = ln(x, p["fng"], p["fnb"])
        x = jax.nn.relu(dot(x, p["w1"]) + p["b1"]); x = ln(x, p["ln1g"], p["ln1b"])
        x = jax.nn.relu(dot(x, p["wh"]) + p["bh"]); x = ln(x, p["lnhg"], p["lnhb"])
        r = jax.nn.sigmoid(dot(x, p["wir"]) + p["bir"] + dot(h0, p["whr"]) + p["bhr"])
        z = jax.nn.sigmoid(dot(x, p["wiz"]) + p["biz"] + dot(h0, p["whz"]) + p["bhz"])
        n = jnp.tanh(dot(x, p["win"]) + p["bin"] + r * (dot(h0, p["whn"]) + p["bhn"]))
        h1 = (1.0 - z) * n + z * h0
        v = dot(ln(h1, p["rng"], p["rnb"]), p["wv"]) + p["bv"]
        return v, h1

    vs, hs = jax.vmap(one_agent)(params, obs_a, rnn_a, mask_a)
    return vs.reshape(NUM_AGENTS * B, 1), hs.reshape(NUM_AGENTS * B, 1, H)


if __name__ == "__main__":
    key = jax.random.PRNGKey(0)
    kp, ko, kr, km = jax.random.split(key, 4)
    params = make_params(kp)
    packed = pack_params(params)

    cent_obs = jax.random.normal(ko, (B * NUM_AGENTS, D), dtype=jnp.float32)
    rnn_states = jax.random.normal(kr, (B * NUM_AGENTS, 1, H), dtype=jnp.float32)
    masks = (jax.random.uniform(km, (B * NUM_AGENTS, 1)) > 0.2).astype(jnp.float32)

    fwd = jax.jit(r_critic_all_forward)
    values, new_rnn = fwd(packed, cent_obs, rnn_states, masks)
    jax.block_until_ready((values, new_rnn))

    v_ref, h_ref = reference_forward(params, cent_obs, rnn_states, masks)
    assert values.shape == (NUM_AGENTS * B, 1)
    assert new_rnn.shape == (NUM_AGENTS * B, 1, H)
    # Tolerance covers matmul-rounding differences between MXU and the XLA reference.
    assert jnp.allclose(values, v_ref, atol=5e-3, rtol=5e-3), \
        float(jnp.abs(values - v_ref).max())
    assert jnp.allclose(new_rnn, h_ref, atol=5e-3, rtol=5e-3), \
        float(jnp.abs(new_rnn - h_ref).max())
    print("KERNEL_OK")
</pallas_src>

<mosaic_0001>
module attributes {stable_mosaic.version = 11 : i64} {
  func.func @critic_all_kernel(%arg0: memref<8x96xf32, #tpu.memory_space<vmem>>, %arg1: memref<8x96xf32, #tpu.memory_space<vmem>>, %arg2: memref<8x96xf32, #tpu.memory_space<vmem>>, %arg3: memref<96x96xf32, #tpu.memory_space<vmem>>, %arg4: memref<96x96xf32, #tpu.memory_space<vmem>>, %arg5: memref<96x288xf32, #tpu.memory_space<vmem>>, %arg6: memref<96x288xf32, #tpu.memory_space<vmem>>, %arg7: memref<96x32xf32, #tpu.memory_space<vmem>>, %arg8: memref<17x96xf32, #tpu.memory_space<vmem>>, %arg9: memref<8x128xf32, #tpu.memory_space<vmem>>) attributes {dimension_semantics = [], scalar_prefetch = 0 : i64, scratch_operands = 0 : i64, tpu.core_type = #tpu.core_type<tc>} {
    %c0 = arith.constant 0 : index
    %c0_0 = arith.constant 0 : index
    %0 = vector.load %arg8[%c0, %c0_0] : memref<17x96xf32, #tpu.memory_space<vmem>>, vector<17x96xf32>
    %c0_1 = arith.constant 0 : index
    %c0_2 = arith.constant 0 : index
    %1 = vector.load %arg0[%c0_1, %c0_2] : memref<8x96xf32, #tpu.memory_space<vmem>>, vector<8x96xf32>
    %c0_3 = arith.constant 0 : index
    %c0_4 = arith.constant 0 : index
    %2 = vector.load %arg1[%c0_3, %c0_4] : memref<8x96xf32, #tpu.memory_space<vmem>>, vector<8x96xf32>
    %c0_5 = arith.constant 0 : index
    %c0_6 = arith.constant 0 : index
    %3 = vector.load %arg2[%c0_5, %c0_6] : memref<8x96xf32, #tpu.memory_space<vmem>>, vector<8x96xf32>
    %4 = arith.mulf %2, %3 : vector<8x96xf32>
    %5 = vector.extract_strided_slice %0 {offsets = [0, 0], sizes = [1, 96], strides = [1, 1]} : vector<17x96xf32> to vector<1x96xf32>
    %6 = vector.extract_strided_slice %0 {offsets = [1, 0], sizes = [1, 96], strides = [1, 1]} : vector<17x96xf32> to vector<1x96xf32>
    %7 = vector.extract_strided_slice %1 {offsets = [0, 0], sizes = [8, 32], strides = [1, 1]} : vector<8x96xf32> to vector<8x32xf32>
    %cst = arith.constant dense<0.000000e+00> : vector<8xf32>
    %8 = vector.multi_reduction <add>, %7, %cst [1] : vector<8x32xf32> to vector<8xf32>
    %9 = vector.shape_cast %8 : vector<8xf32> to vector<8x1xf32>
    %cst_7 = arith.constant 3.200000e+01 : f32
    %10 = vector.broadcast %cst_7 : f32 to vector<8x1xf32>
    %11 = arith.divf %9, %10 : vector<8x1xf32>
    %12 = vector.broadcast %11 : vector<8x1xf32> to vector<8x32xf32>
    %13 = arith.subf %7, %12 : vector<8x32xf32>
    %14 = arith.mulf %13, %13 : vector<8x32xf32>
    %cst_8 = arith.constant dense<0.000000e+00> : vector<8xf32>
    %15 = vector.multi_reduction <add>, %14, %cst_8 [1] : vector<8x32xf32> to vector<8xf32>
    %16 = vector.shape_cast %15 : vector<8xf32> to vector<8x1xf32>
    %cst_9 = arith.constant 3.200000e+01 : f32
    %17 = vector.broadcast %cst_9 : f32 to vector<8x1xf32>
    %18 = arith.divf %16, %17 : vector<8x1xf32>
    %cst_10 = arith.constant 9.99999974E-6 : f32
    %19 = vector.broadcast %cst_10 : f32 to vector<8x1xf32>
    %20 = arith.addf %18, %19 : vector<8x1xf32>
    %21 = math.rsqrt %20 : vector<8x1xf32>
    %22 = vector.broadcast %21 : vector<8x1xf32> to vector<8x32xf32>
    %23 = arith.mulf %13, %22 : vector<8x32xf32>
    %24 = vector.extract_strided_slice %1 {offsets = [0, 32], sizes = [8, 32], strides = [1, 1]} : vector<8x96xf32> to vector<8x32xf32>
    %cst_11 = arith.constant dense<0.000000e+00> : vector<8xf32>
    %25 = vector.multi_reduction <add>, %24, %cst_11 [1] : vector<8x32xf32> to vector<8xf32>
    %26 = vector.shape_cast %25 : vector<8xf32> to vector<8x1xf32>
    %cst_12 = arith.constant 3.200000e+01 : f32
    %27 = vector.broadcast %cst_12 : f32 to vector<8x1xf32>
    %28 = arith.divf %26, %27 : vector<8x1xf32>
    %29 = vector.broadcast %28 : vector<8x1xf32> to vector<8x32xf32>
    %30 = arith.subf %24, %29 : vector<8x32xf32>
    %31 = arith.mulf %30, %30 : vector<8x32xf32>
    %cst_13 = arith.constant dense<0.000000e+00> : vector<8xf32>
    %32 = vector.multi_reduction <add>, %31, %cst_13 [1] : vector<8x32xf32> to vector<8xf32>
    %33 = vector.shape_cast %32 : vector<8xf32> to vector<8x1xf32>
    %cst_14 = arith.constant 3.200000e+01 : f32
    %34 = vector.broadcast %cst_14 : f32 to vector<8x1xf32>
    %35 = arith.divf %33, %34 : vector<8x1xf32>
    %cst_15 = arith.constant 9.99999974E-6 : f32
    %36 = vector.broadcast %cst_15 : f32 to vector<8x1xf32>
    %37 = arith.addf %35, %36 : vector<8x1xf32>
    %38 = math.rsqrt %37 : vector<8x1xf32>
    %39 = vector.broadcast %38 : vector<8x1xf32> to vector<8x32xf32>
    %40 = arith.mulf %30, %39 : vector<8x32xf32>
    %41 = vector.extract_strided_slice %1 {offsets = [0, 64], sizes = [8, 32], strides = [1, 1]} : vector<8x96xf32> to vector<8x32xf32>
    %cst_16 = arith.constant dense<0.000000e+00> : vector<8xf32>
    %42 = vector.multi_reduction <add>, %41, %cst_16 [1] : vector<8x32xf32> to vector<8xf32>
    %43 = vector.shape_cast %42 : vector<8xf32> to vector<8x1xf32>
    %cst_17 = arith.constant 3.200000e+01 : f32
    %44 = vector.broadcast %cst_17 : f32 to vector<8x1xf32>
    %45 = arith.divf %43, %44 : vector<8x1xf32>
    %46 = vector.broadcast %45 : vector<8x1xf32> to vector<8x32xf32>
    %47 = arith.subf %41, %46 : vector<8x32xf32>
    %48 = arith.mulf %47, %47 : vector<8x32xf32>
    %cst_18 = arith.constant dense<0.000000e+00> : vector<8xf32>
    %49 = vector.multi_reduction <add>, %48, %cst_18 [1] : vector<8x32xf32> to vector<8xf32>
    %50 = vector.shape_cast %49 : vector<8xf32> to vector<8x1xf32>
    %cst_19 = arith.constant 3.200000e+01 : f32
    %51 = vector.broadcast %cst_19 : f32 to vector<8x1xf32>
    %52 = arith.divf %50, %51 : vector<8x1xf32>
    %cst_20 = arith.constant 9.99999974E-6 : f32
    %53 = vector.broadcast %cst_20 : f32 to vector<8x1xf32>
    %54 = arith.addf %52, %53 : vector<8x1xf32>
    %55 = math.rsqrt %54 : vector<8x1xf32>
    %56 = vector.broadcast %55 : vector<8x1xf32> to vector<8x32xf32>
    %57 = arith.mulf %47, %56 : vector<8x32xf32>
    %58 = tpu.concatenate %23, %40, %57 in 1 : vector<8x32xf32>, vector<8x32xf32>, vector<8x32xf32> -> vector<8x96xf32>
    %59 = vector.broadcast %5 : vector<1x96xf32> to vector<8x96xf32>
    %60 = arith.mulf %58, %59 : vector<8x96xf32>
    %61 = vector.broadcast %6 : vector<1x96xf32> to vector<8x96xf32>
    %62 = arith.addf %60, %61 : vector<8x96xf32>
    %c0_21 = arith.constant 0 : index
    %c0_22 = arith.constant 0 : index
    %63 = vector.load %arg3[%c0_21, %c0_22] : memref<96x96xf32, #tpu.memory_space<vmem>>, vector<96x96xf32>
    %cst_23 = arith.constant dense<0.000000e+00> : vector<8x96xf32>
    %64 = tpu.matmul %62, %63, %cst_23 {dimension_numbers = #tpu.dot_dimension_numbers<[1], [0], [0], [1], [0, 0, 1, 1], [], []>} : vector<8x96xf32>, vector<96x96xf32>, vector<8x96xf32> -> vector<8x96xf32>
    %65 = vector.extract_strided_slice %0 {offsets = [2, 0], sizes = [1, 96], strides = [1, 1]} : vector<17x96xf32> to vector<1x96xf32>
    %66 = vector.broadcast %65 : vector<1x96xf32> to vector<8x96xf32>
    %67 = arith.addf %64, %66 : vector<8x96xf32>
    %cst_24 = arith.constant 0.000000e+00 : f32
    %68 = vector.broadcast %cst_24 : f32 to vector<8x96xf32>
    %69 = arith.maximumf %67, %68 : vector<8x96xf32>
    %70 = vector.extract_strided_slice %0 {offsets = [3, 0], sizes = [1, 96], strides = [1, 1]} : vector<17x96xf32> to vector<1x96xf32>
    %71 = vector.extract_strided_slice %0 {offsets = [4, 0], sizes = [1, 96], strides = [1, 1]} : vector<17x96xf32> to vector<1x96xf32>
    %72 = vector.extract_strided_slice %69 {offsets = [0, 0], sizes = [8, 32], strides = [1, 1]} : vector<8x96xf32> to vector<8x32xf32>
    %cst_25 = arith.constant dense<0.000000e+00> : vector<8xf32>
    %73 = vector.multi_reduction <add>, %72, %cst_25 [1] : vector<8x32xf32> to vector<8xf32>
    %74 = vector.shape_cast %73 : vector<8xf32> to vector<8x1xf32>
    %cst_26 = arith.constant 3.200000e+01 : f32
    %75 = vector.broadcast %cst_26 : f32 to vector<8x1xf32>
    %76 = arith.divf %74, %75 : vector<8x1xf32>
    %77 = vector.broadcast %76 : vector<8x1xf32> to vector<8x32xf32>
    %78 = arith.subf %72, %77 : vector<8x32xf32>
    %79 = arith.mulf %78, %78 : vector<8x32xf32>
    %cst_27 = arith.constant dense<0.000000e+00> : vector<8xf32>
    %80 = vector.multi_reduction <add>, %79, %cst_27 [1] : vector<8x32xf32> to vector<8xf32>
    %81 = vector.shape_cast %80 : vector<8xf32> to vector<8x1xf32>
    %cst_28 = arith.constant 3.200000e+01 : f32
    %82 = vector.broadcast %cst_28 : f32 to vector<8x1xf32>
    %83 = arith.divf %81, %82 : vector<8x1xf32>
    %cst_29 = arith.constant 9.99999974E-6 : f32
    %84 = vector.broadcast %cst_29 : f32 to vector<8x1xf32>
    %85 = arith.addf %83, %84 : vector<8x1xf32>
    %86 = math.rsqrt %85 : vector<8x1xf32>
    %87 = vector.broadcast %86 : vector<8x1xf32> to vector<8x32xf32>
    %88 = arith.mulf %78, %87 : vector<8x32xf32>
    %89 = vector.extract_strided_slice %69 {offsets = [0, 32], sizes = [8, 32], strides = [1, 1]} : vector<8x96xf32> to vector<8x32xf32>
    %cst_30 = arith.constant dense<0.000000e+00> : vector<8xf32>
    %90 = vector.multi_reduction <add>, %89, %cst_30 [1] : vector<8x32xf32> to vector<8xf32>
    %91 = vector.shape_cast %90 : vector<8xf32> to vector<8x1xf32>
    %cst_31 = arith.constant 3.200000e+01 : f32
    %92 = vector.broadcast %cst_31 : f32 to vector<8x1xf32>
    %93 = arith.divf %91, %92 : vector<8x1xf32>
    %94 = vector.broadcast %93 : vector<8x1xf32> to vector<8x32xf32>
    %95 = arith.subf %89, %94 : vector<8x32xf32>
    %96 = arith.mulf %95, %95 : vector<8x32xf32>
    %cst_32 = arith.constant dense<0.000000e+00> : vector<8xf32>
    %97 = vector.multi_reduction <add>, %96, %cst_32 [1] : vector<8x32xf32> to vector<8xf32>
    %98 = vector.shape_cast %97 : vector<8xf32> to vector<8x1xf32>
    %cst_33 = arith.constant 3.200000e+01 : f32
    %99 = vector.broadcast %cst_33 : f32 to vector<8x1xf32>
    %100 = arith.divf %98, %99 : vector<8x1xf32>
    %cst_34 = arith.constant 9.99999974E-6 : f32
    %101 = vector.broadcast %cst_34 : f32 to vector<8x1xf32>
    %102 = arith.addf %100, %101 : vector<8x1xf32>
    %103 = math.rsqrt %102 : vector<8x1xf32>
    %104 = vector.broadcast %103 : vector<8x1xf32> to vector<8x32xf32>
    %105 = arith.mulf %95, %104 : vector<8x32xf32>
    %106 = vector.extract_strided_slice %69 {offsets = [0, 64], sizes = [8, 32], strides = [1, 1]} : vector<8x96xf32> to vector<8x32xf32>
    %cst_35 = arith.constant dense<0.000000e+00> : vector<8xf32>
    %107 = vector.multi_reduction <add>, %106, %cst_35 [1] : vector<8x32xf32> to vector<8xf32>
    %108 = vector.shape_cast %107 : vector<8xf32> to vector<8x1xf32>
    %cst_36 = arith.constant 3.200000e+01 : f32
    %109 = vector.broadcast %cst_36 : f32 to vector<8x1xf32>
    %110 = arith.divf %108, %109 : vector<8x1xf32>
    %111 = vector.broadcast %110 : vector<8x1xf32> to vector<8x32xf32>
    %112 = arith.subf %106, %111 : vector<8x32xf32>
    %113 = arith.mulf %112, %112 : vector<8x32xf32>
    %cst_37 = arith.constant dense<0.000000e+00> : vector<8xf32>
    %114 = vector.multi_reduction <add>, %113, %cst_37 [1] : vector<8x32xf32> to vector<8xf32>
    %115 = vector.shape_cast %114 : vector<8xf32> to vector<8x1xf32>
    %cst_38 = arith.constant 3.200000e+01 : f32
    %116 = vector.broadcast %cst_38 : f32 to vector<8x1xf32>
    %117 = arith.divf %115, %116 : vector<8x1xf32>
    %cst_39 = arith.constant 9.99999974E-6 : f32
    %118 = vector.broadcast %cst_39 : f32 to vector<8x1xf32>
    %119 = arith.addf %117, %118 : vector<8x1xf32>
    %120 = math.rsqrt %119 : vector<8x1xf32>
    %121 = vector.broadcast %120 : vector<8x1xf32> to vector<8x32xf32>
    %122 = arith.mulf %112, %121 : vector<8x32xf32>
    %123 = tpu.concatenate %88, %105, %122 in 1 : vector<8x32xf32>, vector<8x32xf32>, vector<8x32xf32> -> vector<8x96xf32>
    %124 = vector.broadcast %70 : vector<1x96xf32> to vector<8x96xf32>
    %125 = arith.mulf %123, %124 : vector<8x96xf32>
    %126 = vector.broadcast %71 : vector<1x96xf32> to vector<8x96xf32>
    %127 = arith.addf %125, %126 : vector<8x96xf32>
    %c0_40 = arith.constant 0 : index
    %c0_41 = arith.constant 0 : index
    %128 = vector.load %arg4[%c0_40, %c0_41] : memref<96x96xf32, #tpu.memory_space<vmem>>, vector<96x96xf32>
    %cst_42 = arith.constant dense<0.000000e+00> : vector<8x96xf32>
    %129 = tpu.matmul %127, %128, %cst_42 {dimension_numbers = #tpu.dot_dimension_numbers<[1], [0], [0], [1], [0, 0, 1, 1], [], []>} : vector<8x96xf32>, vector<96x96xf32>, vector<8x96xf32> -> vector<8x96xf32>
    %130 = vector.extract_strided_slice %0 {offsets = [5, 0], sizes = [1, 96], strides = [1, 1]} : vector<17x96xf32> to vector<1x96xf32>
    %131 = vector.broadcast %130 : vector<1x96xf32> to vector<8x96xf32>
    %132 = arith.addf %129, %131 : vector<8x96xf32>
    %cst_43 = arith.constant 0.000000e+00 : f32
    %133 = vector.broadcast %cst_43 : f32 to vector<8x96xf32>
    %134 = arith.maximumf %132, %133 : vector<8x96xf32>
    %135 = vector.extract_strided_slice %0 {offsets = [6, 0], sizes = [1, 96], strides = [1, 1]} : vector<17x96xf32> to vector<1x96xf32>
    %136 = vector.extract_strided_slice %0 {offsets = [7, 0], sizes = [1, 96], strides = [1, 1]} : vector<17x96xf32> to vector<1x96xf32>
    %137 = vector.extract_strided_slice %134 {offsets = [0, 0], sizes = [8, 32], strides = [1, 1]} : vector<8x96xf32> to vector<8x32xf32>
    %cst_44 = arith.constant dense<0.000000e+00> : vector<8xf32>
    %138 = vector.multi_reduction <add>, %137, %cst_44 [1] : vector<8x32xf32> to vector<8xf32>
    %139 = vector.shape_cast %138 : vector<8xf32> to vector<8x1xf32>
    %cst_45 = arith.constant 3.200000e+01 : f32
    %140 = vector.broadcast %cst_45 : f32 to vector<8x1xf32>
    %141 = arith.divf %139, %140 : vector<8x1xf32>
    %142 = vector.broadcast %141 : vector<8x1xf32> to vector<8x32xf32>
    %143 = arith.subf %137, %142 : vector<8x32xf32>
    %144 = arith.mulf %143, %143 : vector<8x32xf32>
    %cst_46 = arith.constant dense<0.000000e+00> : vector<8xf32>
    %145 = vector.multi_reduction <add>, %144, %cst_46 [1] : vector<8x32xf32> to vector<8xf32>
    %146 = vector.shape_cast %145 : vector<8xf32> to vector<8x1xf32>
    %cst_47 = arith.constant 3.200000e+01 : f32
    %147 = vector.broadcast %cst_47 : f32 to vector<8x1xf32>
    %148 = arith.divf %146, %147 : vector<8x1xf32>
    %cst_48 = arith.constant 9.99999974E-6 : f32
    %149 = vector.broadcast %cst_48 : f32 to vector<8x1xf32>
    %150 = arith.addf %148, %149 : vector<8x1xf32>
    %151 = math.rsqrt %150 : vector<8x1xf32>
    %152 = vector.broadcast %151 : vector<8x1xf32> to vector<8x32xf32>
    %153 = arith.mulf %143, %152 : vector<8x32xf32>
    %154 = vector.extract_strided_slice %134 {offsets = [0, 32], sizes = [8, 32], strides = [1, 1]} : vector<8x96xf32> to vector<8x32xf32>
    %cst_49 = arith.constant dense<0.000000e+00> : vector<8xf32>
    %155 = vector.multi_reduction <add>, %154, %cst_49 [1] : vector<8x32xf32> to vector<8xf32>
    %156 = vector.shape_cast %155 : vector<8xf32> to vector<8x1xf32>
    %cst_50 = arith.constant 3.200000e+01 : f32
    %157 = vector.broadcast %cst_50 : f32 to vector<8x1xf32>
    %158 = arith.divf %156, %157 : vector<8x1xf32>
    %159 = vector.broadcast %158 : vector<8x1xf32> to vector<8x32xf32>
    %160 = arith.subf %154, %159 : vector<8x32xf32>
    %161 = arith.mulf %160, %160 : vector<8x32xf32>
    %cst_51 = arith.constant dense<0.000000e+00> : vector<8xf32>
    %162 = vector.multi_reduction <add>, %161, %cst_51 [1] : vector<8x32xf32> to vector<8xf32>
    %163 = vector.shape_cast %162 : vector<8xf32> to vector<8x1xf32>
    %cst_52 = arith.constant 3.200000e+01 : f32
    %164 = vector.broadcast %cst_52 : f32 to vector<8x1xf32>
    %165 = arith.divf %163, %164 : vector<8x1xf32>
    %cst_53 = arith.constant 9.99999974E-6 : f32
    %166 = vector.broadcast %cst_53 : f32 to vector<8x1xf32>
    %167 = arith.addf %165, %166 : vector<8x1xf32>
    %168 = math.rsqrt %167 : vector<8x1xf32>
    %169 = vector.broadcast %168 : vector<8x1xf32> to vector<8x32xf32>
    %170 = arith.mulf %160, %169 : vector<8x32xf32>
    %171 = vector.extract_strided_slice %134 {offsets = [0, 64], sizes = [8, 32], strides = [1, 1]} : vector<8x96xf32> to vector<8x32xf32>
    %cst_54 = arith.constant dense<0.000000e+00> : vector<8xf32>
    %172 = vector.multi_reduction <add>, %171, %cst_54 [1] : vector<8x32xf32> to vector<8xf32>
    %173 = vector.shape_cast %172 : vector<8xf32> to vector<8x1xf32>
    %cst_55 = arith.constant 3.200000e+01 : f32
    %174 = vector.broadcast %cst_55 : f32 to vector<8x1xf32>
    %175 = arith.divf %173, %174 : vector<8x1xf32>
    %176 = vector.broadcast %175 : vector<8x1xf32> to vector<8x32xf32>
    %177 = arith.subf %171, %176 : vector<8x32xf32>
    %178 = arith.mulf %177, %177 : vector<8x32xf32>
    %cst_56 = arith.constant dense<0.000000e+00> : vector<8xf32>
    %179 = vector.multi_reduction <add>, %178, %cst_56 [1] : vector<8x32xf32> to vector<8xf32>
    %180 = vector.shape_cast %179 : vector<8xf32> to vector<8x1xf32>
    %cst_57 = arith.constant 3.200000e+01 : f32
    %181 = vector.broadcast %cst_57 : f32 to vector<8x1xf32>
    %182 = arith.divf %180, %181 : vector<8x1xf32>
    %cst_58 = arith.constant 9.99999974E-6 : f32
    %183 = vector.broadcast %cst_58 : f32 to vector<8x1xf32>
    %184 = arith.addf %182, %183 : vector<8x1xf32>
    %185 = math.rsqrt %184 : vector<8x1xf32>
    %186 = vector.broadcast %185 : vector<8x1xf32> to vector<8x32xf32>
    %187 = arith.mulf %177, %186 : vector<8x32xf32>
    %188 = tpu.concatenate %153, %170, %187 in 1 : vector<8x32xf32>, vector<8x32xf32>, vector<8x32xf32> -> vector<8x96xf32>
    %189 = vector.broadcast %135 : vector<1x96xf32> to vector<8x96xf32>
    %190 = arith.mulf %188, %189 : vector<8x96xf32>
    %191 = vector.broadcast %136 : vector<1x96xf32> to vector<8x96xf32>
    %192 = arith.addf %190, %191 : vector<8x96xf32>
    %c0_59 = arith.constant 0 : index
    %c0_60 = arith.constant 0 : index
    %193 = vector.load %arg5[%c0_59, %c0_60] : memref<96x288xf32, #tpu.memory_space<vmem>>, vector<96x288xf32>
    %cst_61 = arith.constant dense<0.000000e+00> : vector<8x288xf32>
    %194 = tpu.matmul %192, %193, %cst_61 {dimension_numbers = #tpu.dot_dimension_numbers<[1], [0], [0], [1], [0, 0, 1, 1], [], []>} : vector<8x96xf32>, vector<96x288xf32>, vector<8x288xf32> -> vector<8x288xf32>
    %c0_62 = arith.constant 0 : index
    %c0_63 = arith.constant 0 : index
    %195 = vector.load %arg6[%c0_62, %c0_63] : memref<96x288xf32, #tpu.memory_space<vmem>>, vector<96x288xf32>
    %cst_64 = arith.constant dense<0.000000e+00> : vector<8x288xf32>
    %196 = tpu.matmul %4, %195, %cst_64 {dimension_numbers = #tpu.dot_dimension_numbers<[1], [0], [0], [1], [0, 0, 1, 1], [], []>} : vector<8x96xf32>, vector<96x288xf32>, vector<8x288xf32> -> vector<8x288xf32>
    %197 = vector.extract_strided_slice %194 {offsets = [0, 0], sizes = [8, 96], strides = [1, 1]} : vector<8x288xf32> to vector<8x96xf32>
    %198 = vector.extract_strided_slice %0 {offsets = [8, 0], sizes = [1, 96], strides = [1, 1]} : vector<17x96xf32> to vector<1x96xf32>
    %199 = vector.broadcast %198 : vector<1x96xf32> to vector<8x96xf32>
    %200 = arith.addf %197, %199 : vector<8x96xf32>
    %201 = vector.extract_strided_slice %196 {offsets = [0, 0], sizes = [8, 96], strides = [1, 1]} : vector<8x288xf32> to vector<8x96xf32>
    %202 = arith.addf %200, %201 : vector<8x96xf32>
    %203 = vector.extract_strided_slice %0 {offsets = [11, 0], sizes = [1, 96], strides = [1, 1]} : vector<17x96xf32> to vector<1x96xf32>
    %204 = vector.broadcast %203 : vector<1x96xf32> to vector<8x96xf32>
    %205 = arith.addf %202, %204 : vector<8x96xf32>
    %206 = arith.negf %205 : vector<8x96xf32>
    %207 = math.exp %206 : vector<8x96xf32>
    %cst_65 = arith.constant 1.000000e+00 : f32
    %208 = vector.broadcast %cst_65 : f32 to vector<8x96xf32>
    %209 = arith.addf %208, %207 : vector<8x96xf32>
    %210 = arith.divf %208, %209 : vector<8x96xf32>
    %211 = vector.extract_strided_slice %194 {offsets = [0, 96], sizes = [8, 96], strides = [1, 1]} : vector<8x288xf32> to vector<8x96xf32>
    %212 = vector.extract_strided_slice %0 {offsets = [9, 0], sizes = [1, 96], strides = [1, 1]} : vector<17x96xf32> to vector<1x96xf32>
    %213 = vector.broadcast %212 : vector<1x96xf32> to vector<8x96xf32>
    %214 = arith.addf %211, %213 : vector<8x96xf32>
    %215 = vector.extract_strided_slice %196 {offsets = [0, 96], sizes = [8, 96], strides = [1, 1]} : vector<8x288xf32> to vector<8x96xf32>
    %216 = arith.addf %214, %215 : vector<8x96xf32>
    %217 = vector.extract_strided_slice %0 {offsets = [12, 0], sizes = [1, 96], strides = [1, 1]} : vector<17x96xf32> to vector<1x96xf32>
    %218 = vector.broadcast %217 : vector<1x96xf32> to vector<8x96xf32>
    %219 = arith.addf %216, %218 : vector<8x96xf32>
    %220 = arith.negf %219 : vector<8x96xf32>
    %221 = math.exp %220 : vector<8x96xf32>
    %cst_66 = arith.constant 1.000000e+00 : f32
    %222 = vector.broadcast %cst_66 : f32 to vector<8x96xf32>
    %223 = arith.addf %222, %221 : vector<8x96xf32>
    %224 = arith.divf %222, %223 : vector<8x96xf32>
    %225 = vector.extract_strided_slice %194 {offsets = [0, 192], sizes = [8, 96], strides = [1, 1]} : vector<8x288xf32> to vector<8x96xf32>
    %226 = vector.extract_strided_slice %0 {offsets = [10, 0], sizes = [1, 96], strides = [1, 1]} : vector<17x96xf32> to vector<1x96xf32>
    %227 = vector.broadcast %226 : vector<1x96xf32> to vector<8x96xf32>
    %228 = arith.addf %225, %227 : vector<8x96xf32>
    %229 = vector.extract_strided_slice %196 {offsets = [0, 192], sizes = [8, 96], strides = [1, 1]} : vector<8x288xf32> to vector<8x96xf32>
    %230 = vector.extract_strided_slice %0 {offsets = [13, 0], sizes = [1, 96], strides = [1, 1]} : vector<17x96xf32> to vector<1x96xf32>
    %231 = vector.broadcast %230 : vector<1x96xf32> to vector<8x96xf32>
    %232 = arith.addf %229, %231 : vector<8x96xf32>
    %233 = arith.mulf %210, %232 : vector<8x96xf32>
    %234 = arith.addf %228, %233 : vector<8x96xf32>
    %235 = math.tanh %234 : vector<8x96xf32>
    %cst_67 = arith.constant 1.000000e+00 : f32
    %236 = vector.broadcast %cst_67 : f32 to vector<8x96xf32>
    %237 = arith.subf %236, %224 : vector<8x96xf32>
    %238 = arith.mulf %237, %235 : vector<8x96xf32>
    %239 = arith.mulf %224, %4 : vector<8x96xf32>
    %240 = arith.addf %238, %239 : vector<8x96xf32>
    %241 = vector.extract_strided_slice %0 {offsets = [14, 0], sizes = [1, 96], strides = [1, 1]} : vector<17x96xf32> to vector<1x96xf32>
    %242 = vector.extract_strided_slice %0 {offsets = [15, 0], sizes = [1, 96], strides = [1, 1]} : vector<17x96xf32> to vector<1x96xf32>
    %243 = vector.extract_strided_slice %240 {offsets = [0, 0], sizes = [8, 32], strides = [1, 1]} : vector<8x96xf32> to vector<8x32xf32>
    %cst_68 = arith.constant dense<0.000000e+00> : vector<8xf32>
    %244 = vector.multi_reduction <add>, %243, %cst_68 [1] : vector<8x32xf32> to vector<8xf32>
    %245 = vector.shape_cast %244 : vector<8xf32> to vector<8x1xf32>
    %cst_69 = arith.constant 3.200000e+01 : f32
    %246 = vector.broadcast %cst_69 : f32 to vector<8x1xf32>
    %247 = arith.divf %245, %246 : vector<8x1xf32>
    %248 = vector.broadcast %247 : vector<8x1xf32> to vector<8x32xf32>
    %249 = arith.subf %243, %248 : vector<8x32xf32>
    %250 = arith.mulf %249, %249 : vector<8x32xf32>
    %cst_70 = arith.constant dense<0.000000e+00> : vector<8xf32>
    %251 = vector.multi_reduction <add>, %250, %cst_70 [1] : vector<8x32xf32> to vector<8xf32>
    %252 = vector.shape_cast %251 : vector<8xf32> to vector<8x1xf32>
    %cst_71 = arith.constant 3.200000e+01 : f32
    %253 = vector.broadcast %cst_71 : f32 to vector<8x1xf32>
    %254 = arith.divf %252, %253 : vector<8x1xf32>
    %cst_72 = arith.constant 9.99999974E-6 : f32
    %255 = vector.broadcast %cst_72 : f32 to vector<8x1xf32>
    %256 = arith.addf %254, %255 : vector<8x1xf32>
    %257 = math.rsqrt %256 : vector<8x1xf32>
    %258 = vector.broadcast %257 : vector<8x1xf32> to vector<8x32xf32>
    %259 = arith.mulf %249, %258 : vector<8x32xf32>
    %260 = vector.extract_strided_slice %240 {offsets = [0, 32], sizes = [8, 32], strides = [1, 1]} : vector<8x96xf32> to vector<8x32xf32>
    %cst_73 = arith.constant dense<0.000000e+00> : vector<8xf32>
    %261 = vector.multi_reduction <add>, %260, %cst_73 [1] : vector<8x32xf32> to vector<8xf32>
    %262 = vector.shape_cast %261 : vector<8xf32> to vector<8x1xf32>
    %cst_74 = arith.constant 3.200000e+01 : f32
    %263 = vector.broadcast %cst_74 : f32 to vector<8x1xf32>
    %264 = arith.divf %262, %263 : vector<8x1xf32>
    %265 = vector.broadcast %264 : vector<8x1xf32> to vector<8x32xf32>
    %266 = arith.subf %260, %265 : vector<8x32xf32>
    %267 = arith.mulf %266, %266 : vector<8x32xf32>
    %cst_75 = arith.constant dense<0.000000e+00> : vector<8xf32>
    %268 = vector.multi_reduction <add>, %267, %cst_75 [1] : vector<8x32xf32> to vector<8xf32>
    %269 = vector.shape_cast %268 : vector<8xf32> to vector<8x1xf32>
    %cst_76 = arith.constant 3.200000e+01 : f32
    %270 = vector.broadcast %cst_76 : f32 to vector<8x1xf32>
    %271 = arith.divf %269, %270 : vector<8x1xf32>
    %cst_77 = arith.constant 9.99999974E-6 : f32
    %272 = vector.broadcast %cst_77 : f32 to vector<8x1xf32>
    %273 = arith.addf %271, %272 : vector<8x1xf32>
    %274 = math.rsqrt %273 : vector<8x1xf32>
    %275 = vector.broadcast %274 : vector<8x1xf32> to vector<8x32xf32>
    %276 = arith.mulf %266, %275 : vector<8x32xf32>
    %277 = vector.extract_strided_slice %240 {offsets = [0, 64], sizes = [8, 32], strides = [1, 1]} : vector<8x96xf32> to vector<8x32xf32>
    %cst_78 = arith.constant dense<0.000000e+00> : vector<8xf32>
    %278 = vector.multi_reduction <add>, %277, %cst_78 [1] : vector<8x32xf32> to vector<8xf32>
    %279 = vector.shape_cast %278 : vector<8xf32> to vector<8x1xf32>
    %cst_79 = arith.constant 3.200000e+01 : f32
    %280 = vector.broadcast %cst_79 : f32 to vector<8x1xf32>
    %281 = arith.divf %279, %280 : vector<8x1xf32>
    %282 = vector.broadcast %281 : vector<8x1xf32> to vector<8x32xf32>
    %283 = arith.subf %277, %282 : vector<8x32xf32>
    %284 = arith.mulf %283, %283 : vector<8x32xf32>
    %cst_80 = arith.constant dense<0.000000e+00> : vector<8xf32>
    %285 = vector.multi_reduction <add>, %284, %cst_80 [1] : vector<8x32xf32> to vector<8xf32>
    %286 = vector.shape_cast %285 : vector<8xf32> to vector<8x1xf32>
    %cst_81 = arith.constant 3.200000e+01 : f32
    %287 = vector.broadcast %cst_81 : f32 to vector<8x1xf32>
    %288 = arith.divf %286, %287 : vector<8x1xf32>
    %cst_82 = arith.constant 9.99999974E-6 : f32
    %289 = vector.broadcast %cst_82 : f32 to vector<8x1xf32>
    %290 = arith.addf %288, %289 : vector<8x1xf32>
    %291 = math.rsqrt %290 : vector<8x1xf32>
    %292 = vector.broadcast %291 : vector<8x1xf32> to vector<8x32xf32>
    %293 = arith.mulf %283, %292 : vector<8x32xf32>
    %294 = tpu.concatenate %259, %276, %293 in 1 : vector<8x32xf32>, vector<8x32xf32>, vector<8x32xf32> -> vector<8x96xf32>
    %295 = vector.broadcast %241 : vector<1x96xf32> to vector<8x96xf32>
    %296 = arith.mulf %294, %295 : vector<8x96xf32>
    %297 = vector.broadcast %242 : vector<1x96xf32> to vector<8x96xf32>
    %298 = arith.addf %296, %297 : vector<8x96xf32>
    %c0_83 = arith.constant 0 : index
    %c0_84 = arith.constant 0 : index
    %299 = vector.load %arg7[%c0_83, %c0_84] : memref<96x32xf32, #tpu.memory_space<vmem>>, vector<96x32xf32>
    %cst_85 = arith.constant dense<0.000000e+00> : vector<8x32xf32>
    %300 = tpu.matmul %298, %299, %cst_85 {dimension_numbers = #tpu.dot_dimension_numbers<[1], [0], [0], [1], [0, 0, 1, 1], [], []>} : vector<8x96xf32>, vector<96x32xf32>, vector<8x32xf32> -> vector<8x32xf32>
    %301 = vector.extract_strided_slice %0 {offsets = [16, 0], sizes = [1, 32], strides = [1, 1]} : vector<17x96xf32> to vector<1x32xf32>
    %302 = vector.broadcast %301 : vector<1x32xf32> to vector<8x32xf32>
    %303 = arith.addf %300, %302 : vector<8x32xf32>
    %c0_86 = arith.constant 0 : index
    %c0_87 = arith.constant 0 : index
    %304 = vector.load %arg9[%c0_86, %c0_87] : memref<8x128xf32, #tpu.memory_space<vmem>>, vector<8x96xf32>
    tpu.vector_store %arg9[%c0_86, %c0_87], %240 {strides = array<i32>} : memref<8x128xf32, #tpu.memory_space<vmem>>, vector<8x96xf32>,
    %c0_88 = arith.constant 0 : index
    %c96 = arith.constant 96 : index
    %305 = vector.load %arg9[%c0_88, %c96] : memref<8x128xf32, #tpu.memory_space<vmem>>, vector<8x32xf32>
    tpu.vector_store %arg9[%c0_88, %c96], %303 {strides = array<i32>} : memref<8x128xf32, #tpu.memory_space<vmem>>, vector<8x32xf32>,
    return
  }
}

</mosaic_0001>

<llo_original>
// kernel: r_critic_all_forward.1
$region0: #{r_critic_all_forward.1}
  #allocation0 [shape = 'u32[]', space=smem, size = 0x4, offset = 0x4, fixed_abs, tag = 'smem constant byte address 0x4 - core index']
  #allocation1 [shape = 'u32[144,128]{1,0:T(1,128)}', space=vmem, size = 0x12000, scoped, tag = 'internal scratch']
  %s0 = inlined_call_operand.vmem [shape: f32[8,96], index: 0, kind: input, shape index: {}]
  %s1 = inlined_call_operand.vmem [shape: f32[8,96], index: 1, kind: input, shape index: {}]
  %s2 = inlined_call_operand.vmem [shape: f32[8,96], index: 2, kind: input, shape index: {}]
  %s3 = inlined_call_operand.hbm [shape: f32[96,96], index: 3, kind: input, shape index: {}]
  %s4 = inlined_call_operand.hbm [shape: f32[96,96], index: 4, kind: input, shape index: {}]
  %s5 = inlined_call_operand.vmem [shape: f32[96,288], index: 5, kind: input, shape index: {}]
  %s6 = inlined_call_operand.hbm [shape: f32[96,288], index: 6, kind: input, shape index: {}]
  %s7 = inlined_call_operand.vmem [shape: f32[96,32], index: 7, kind: input, shape index: {}]
  %s8 = inlined_call_operand.hbm [shape: f32[17,96], index: 8, kind: input, shape index: {}]
  %s9 = inlined_call_operand.vmem [shape: f32[8,128], index: 9, kind: output, shape index: {}]
  %s10 = sld [smem:[#allocation0]]
  $region62: #{r_critic_all_forward.1} parent=0
    _
  %s12 = ssub.s32 1, %s10
  %s13 = scalar_select 0, %s12, %s10
  $region1: #{r_critic_all_forward.1} parent=0
    #allocation2 [shape = 'u8[49152]{0}', space=vmem, size = 0xc000, scoped, tag = 'input window, operand 3, single buffered']
    #allocation3 [shape = 's32[1]{0}', space=sflag, size = 0x4, scoped, tag = 'scoped memory for r_critic_all_forward.1']
    #allocation4 [shape = 'u8[49152]{0}', space=vmem, size = 0xc000, scoped, tag = 'input window, operand 4, single buffered']
    #allocation5 [shape = 's32[1]{0}', space=sflag, size = 0x4, scoped, tag = 'scoped memory for r_critic_all_forward.1']
    #allocation6 [shape = 'u8[147456]{0}', space=vmem, size = 0x24000, scoped, tag = 'input window, operand 6, single buffered']
    #allocation7 [shape = 'u8[12288]{0}', space=vmem, size = 0x3000, scoped, tag = 'input window, operand 8, single buffered']
    #allocation8 [shape = 's32[1]{0}', space=sflag, size = 0x4, scoped, tag = 'scoped memory for r_critic_all_forward.1']
    %14 = vsyncpa [#allocation3], 0
    %15 = vsyncpa [#allocation5], 0
    %16 = vsyncpa [#allocation8], 0
    // Predicated region
    $region2: #{r_critic_all_forward.1} parent=1 // pred_check
      _
    $region3: #{r_critic_all_forward.1} parent=1 // pred_check_branch
      %18 = sbr.rel (0) target = $region5
    $region4: #{r_critic_all_forward.1} parent=1 // pred_region
      _
    $region5: #{r_critic_all_forward.1} parent=1 // pred_fallthru
      _
    // Predicated region
    $region6: #{r_critic_all_forward.1} parent=1 // pred_check
      _
    $region7: #{r_critic_all_forward.1} parent=1 // pred_check_branch
      %20 = sbr.rel (0) target = $region9
    $region8: #{r_critic_all_forward.1} parent=1 // pred_region
      _
    $region9: #{r_critic_all_forward.1} parent=1 // pred_fallthru
      _
    // Predicated region
    $region10: #{r_critic_all_forward.1} parent=1 // pred_check
      _
    $region11: #{r_critic_all_forward.1} parent=1 // pred_check_branch
      %22 = sbr.rel (0) target = $region13
    $region12: #{r_critic_all_forward.1} parent=1 // pred_region
      _
    $region13: #{r_critic_all_forward.1} parent=1 // pred_fallthru
      _
    // Predicated region
    $region14: #{r_critic_all_forward.1} parent=1 // pred_check
      _
    $region15: #{r_critic_all_forward.1} parent=1 // pred_check_branch
      %24 = sbr.rel (0) target = $region17
    $region16: #{r_critic_all_forward.1} parent=1 // pred_region
      %s26 = ssub.s32 1536, 1536
      %27 = vsyncadd [#allocation3], %s26
      %s28 = sshll.u32 [#allocation2], 4
      %s29 = int_to_ptr.vmem [resolvable:$true] %s28
      %34 = dma.hbm_to_vmem [thread:$0]  %s3, 1536, %s29, [#allocation3], 128, 128, 8
    $region17: #{r_critic_all_forward.1} parent=1 // pred_fallthru
      _
    // Predicated region
    $region18: #{r_critic_all_forward.1} parent=1 // pred_check
      _
    $region19: #{r_critic_all_forward.1} parent=1 // pred_check_branch
      %36 = sbr.rel (0) target = $region21
    $region20: #{r_critic_all_forward.1} parent=1 // pred_region
      %s38 = ssub.s32 1536, 1536
      %39 = vsyncadd [#allocation5], %s38
      %s40 = sshll.u32 [#allocation4], 4
      %s41 = int_to_ptr.vmem [resolvable:$true] %s40
      %46 = dma.hbm_to_vmem [thread:$0]  %s4, 1536, %s41, [#allocation5], 128, 128, 8
    $region21: #{r_critic_all_forward.1} parent=1 // pred_fallthru
      _
    // Predicated region
    $region22: #{r_critic_all_forward.1} parent=1 // pred_check
      _
    $region23: #{r_critic_all_forward.1} parent=1 // pred_check_branch
      %48 = sbr.rel (0) target = $region25
    $region24: #{r_critic_all_forward.1} parent=1 // pred_region
      _
    $region25: #{r_critic_all_forward.1} parent=1 // pred_fallthru
      _
    // Predicated region
    $region26: #{r_critic_all_forward.1} parent=1 // pred_check
      _
    $region27: #{r_critic_all_forward.1} parent=1 // pred_check_branch
      %50 = sbr.rel (0) target = $region29
    $region28: #{r_critic_all_forward.1} parent=1 // pred_region
      %s52 = ssub.s32 4608, 4608
      %53 = vsyncadd [#allocation5], %s52
      %s54 = sshll.u32 [#allocation6], 4
      %s55 = int_to_ptr.vmem [resolvable:$true] %s54
      %60 = dma.hbm_to_vmem [thread:$0]  %s6, 4608, %s55, [#allocation5], 384, 384, 24
    $region29: #{r_critic_all_forward.1} parent=1 // pred_fallthru
      _
    // Predicated region
    $region30: #{r_critic_all_forward.1} parent=1 // pred_check
      _
    $region31: #{r_critic_all_forward.1} parent=1 // pred_check_branch
      %62 = sbr.rel (0) target = $region33
    $region32: #{r_critic_all_forward.1} parent=1 // pred_region
      _
    $region33: #{r_critic_all_forward.1} parent=1 // pred_fallthru
      _
    // Predicated region
    $region34: #{r_critic_all_forward.1} parent=1 // pred_check
      _
    $region35: #{r_critic_all_forward.1} parent=1 // pred_check_branch
      %64 = sbr.rel (0) target = $region37
    $region36: #{r_critic_all_forward.1} parent=1 // pred_region
      %s66 = ssub.s32 384, 384
      %67 = vsyncadd [#allocation8], %s66
      %s68 = sshll.u32 [#allocation7], 4
      %s69 = int_to_ptr.vmem [resolvable:$true] %s68
      %74 = dma.hbm_to_vmem [thread:$0]  %s8, 384, %s69, [#allocation8], 128, 128, 8
    $region37: #{r_critic_all_forward.1} parent=1 // pred_fallthru
      _
    // Predicated region
    $region38: #{r_critic_all_forward.1} parent=1 // pred_check
      _
    $region39: #{r_critic_all_forward.1} parent=1 // pred_check_branch
      %76 = sbr.rel (0) target = $region41
    $region40: #{r_critic_all_forward.1} parent=1 // pred_region
      %77 = dma.done [#allocation3], 1536
    $region41: #{r_critic_all_forward.1} parent=1 // pred_fallthru
      _
    // Predicated region
    $region42: #{r_critic_all_forward.1} parent=1 // pred_check
      _
    $region43: #{r_critic_all_forward.1} parent=1 // pred_check_branch
      %79 = sbr.rel (0) target = $region45
    $region44: #{r_critic_all_forward.1} parent=1 // pred_region
      %80 = dma.done [#allocation5], 1536
    $region45: #{r_critic_all_forward.1} parent=1 // pred_fallthru
      _
    // Predicated region
    $region46: #{r_critic_all_forward.1} parent=1 // pred_check
      _
    $region47: #{r_critic_all_forward.1} parent=1 // pred_check_branch
      %82 = sbr.rel (0) target = $region49
    $region48: #{r_critic_all_forward.1} parent=1 // pred_region
      %83 = dma.done [#allocation5], 4608
    $region49: #{r_critic_all_forward.1} parent=1 // pred_fallthru
      _
    // Predicated region
    $region50: #{r_critic_all_forward.1} parent=1 // pred_check
      _
    $region51: #{r_critic_all_forward.1} parent=1 // pred_check_branch
      %85 = sbr.rel (0) target = $region53
    $region52: #{r_critic_all_forward.1} parent=1 // pred_region
      %86 = dma.done [#allocation8], 384
    $region53: #{r_critic_all_forward.1} parent=1 // pred_fallthru
      _
    %v87 = vld [vmem:[#allocation7] sm:$0xff]
    %v88 = vld [vmem:[#allocation7 + $0x8] sm:$0xff]
    %v89 = vld [vmem:[#allocation7 + $0x10] sm:$0x1]
    %v90 = vld [vmem:[%s0] sm:$0xff]
    %v91 = vld [vmem:[%s1] sm:$0xff]
    %v92 = vld [vmem:[%s2] sm:$0xff]
    %v93 = vmul.f32 %v91, %v92
    %vm94 = vcmask 261120
    %v95 = vsel %vm94, %v90, 0.0
    %96 = vadd.xlane.f32.xlu0 %v95
    %v97 = vpop.xlane.xlu0 %96
    %v98 = vrcp.pop 32.0
    %v99 = vmul.f32 %v97, %v98
    %v100 = vsub.f32 %v90, %v99
    %v101 = vmul.f32 %v100, %v100
    %v102 = vsel %vm94, %v101, 0.0
    %103 = vadd.xlane.f32.xlu0 %v102
    %v104 = vpop.xlane.xlu0 %103
    %v105 = vmul.f32 %v104, %v98
    %v106 = vadd.f32 %v105, 1e-05
    %v107 = vrsqrt.pop %v106
    %v108 = vmul.f32 %v100, %v107
    %110 = vrot.lane.b32.xlu0 %v90, 96
    %v111 = vpop.permute.xlu0 %110
    %v113 = vsel %vm94, %v111, 0.0
    %114 = vadd.xlane.f32.xlu0 %v113
    %v115 = vpop.xlane.xlu0 %114
    %v116 = vmul.f32 %v115, %v98
    %v117 = vsub.f32 %v90, %v116
    %v118 = vmul.f32 %v117, %v117
    %120 = vrot.lane.b32.xlu0 %v118, 96
    %v121 = vpop.permute.xlu0 %120
    %v123 = vsel %vm94, %v121, 0.0
    %124 = vadd.xlane.f32.xlu0 %v123
    %v125 = vpop.xlane.xlu0 %124
    %v126 = vmul.f32 %v125, %v98
    %v127 = vadd.f32 %v126, 1e-05
    %v128 = vrsqrt.pop %v127
    %v129 = vmul.f32 %v117, %v128
    %130 = vrot.lane.b32.xlu0 %v90, 64
    %v131 = vpop.permute.xlu0 %130
    %v133 = vsel %vm94, %v131, 0.0
    %134 = vadd.xlane.f32.xlu0 %v133
    %v135 = vpop.xlane.xlu0 %134
    %v136 = vmul.f32 %v135, %v98
    %v137 = vsub.f32 %v90, %v136
    %v138 = vmul.f32 %v137, %v137
    %140 = vrot.lane.b32.xlu0 %v138, 64
    %v141 = vpop.permute.xlu0 %140
    %v143 = vsel %vm94, %v141, 0.0
    %144 = vadd.xlane.f32.xlu0 %v143
    %v145 = vpop.xlane.xlu0 %144
    %v146 = vmul.f32 %v145, %v98
    %v147 = vadd.f32 %v146, 1e-05
    %v148 = vrsqrt.pop %v147
    %v149 = vmul.f32 %v137, %v148
    %v150 = vsel %vm94, %v108, %v129
    %vm151 = vcmask 523264
    %v152 = vsel %vm151, %v150, %v149
    %v153 = vlaneseq
    %v154 = vshrl.u32 %v153, 7
    %v155 = vsub.s32 0, %v154
    %v156 = vrot.slane %v87, %v155
    %v157 = vmul.f32 %v152, %v156
    %v158 = vlaneseq
    %v159 = vshrl.u32 %v158, 7
    %v160 = vsub.s32 1, %v159
    %v161 = vrot.slane %v87, %v160
    %v162 = vadd.f32 %v157, %v161
    %v163 = vld [vmem:[#allocation2] sm:$0xff]
    %v164 = vld [vmem:[#allocation2 + $0x8] sm:$0xff]
    %v165 = vld [vmem:[#allocation2 + $0x10] sm:$0xff]
    %v166 = vld [vmem:[#allocation2 + $0x18] sm:$0xff]
    %v167 = vld [vmem:[#allocation2 + $0x20] sm:$0xff]
    %v168 = vld [vmem:[#allocation2 + $0x28] sm:$0xff]
    %v169 = vld [vmem:[#allocation2 + $0x30] sm:$0xff]
    %v170 = vld [vmem:[#allocation2 + $0x38] sm:$0xff]
    %v171 = vld [vmem:[#allocation2 + $0x40] sm:$0xff]
    %v172 = vld [vmem:[#allocation2 + $0x48] sm:$0xff]
    %v173 = vld [vmem:[#allocation2 + $0x50] sm:$0xff]
    %v174 = vld [vmem:[#allocation2 + $0x58] sm:$0xff]
    %v175 = vlaneseq
    %v176 = vshrl.u32 %v175, 7
    %v177 = vsub.s32 2, %v176
    %v178 = vrot.slane %v87, %v177
    %vm179 = vcmask 785408
    %v181 = vsel %vm179, %v162, 0
    %183 = vmatprep.subr.mxu0 0.0
    %184 = vmatpush1.msra.mxu0 0.0
    %185 = vmatprep.subr.mxu0 0.0
    %186 = vmatpush1.msra.mxu0 0.0
    %187 = vmatprep.subr.mxu0 0.0
    %188 = vmatpush1.msra.mxu0 0.0
    %189 = vmatprep.subr.mxu0 0.0
    %190 = vmatpush1.msra.mxu0 0.0
    %191 = vmatprep.subr.mxu0 0.0
    %192 = vmatpush1.msra.mxu0 %v174
    %193 = vmatprep.subr.mxu0 0.0
    %194 = vmatpush1.msra.mxu0 %v173
    %195 = vmatprep.subr.mxu0 0.0
    %196 = vmatpush1.msra.mxu0 %v172
    %197 = vmatprep.subr.mxu0 0.0
    %198 = vmatpush1.msra.mxu0 %v171
    %199 = vmatprep.subr.mxu0 0.0
    %200 = vmatpush1.msra.mxu0 %v170
    %201 = vmatprep.subr.mxu0 0.0
    %202 = vmatpush1.msra.mxu0 %v169
    %203 = vmatprep.subr.mxu0 0.0
    %204 = vmatpush1.msra.mxu0 %v168
    %205 = vmatprep.subr.mxu0 0.0
    %206 = vmatpush1.msra.mxu0 %v167
    %207 = vmatprep.subr.mxu0 0.0
    %208 = vmatpush1.msra.mxu0 %v166
    %209 = vmatprep.subr.mxu0 0.0
    %210 = vmatpush1.msra.mxu0 %v165
    %211 = vmatprep.subr.mxu0 0.0
    %212 = vmatpush1.msra.mxu0 %v164
    %213 = vmatprep.subr.mxu0 0.0
    %214 = vmatpush1.msra.mxu0 %v163
    %215 = vmatprep.subr.mxu0 0.0
    %216 = vmatpush2.msra.mxu0 0.0
    %217 = vmatprep.subr.mxu0 0.0
    %218 = vmatpush2.msra.mxu0 0.0
    %219 = vmatprep.subr.mxu0 0.0
    %220 = vmatpush2.msra.mxu0 0.0
    %221 = vmatprep.subr.mxu0 0.0
    %222 = vmatpush2.msra.mxu0 0.0
    %223 = vmatprep.subr.mxu0 0.0
    %224 = vmatpush2.msra.mxu0 0.0
    %225 = vmatprep.subr.mxu0 0.0
    %226 = vmatpush2.msra.mxu0 0.0
    %227 = vmatprep.subr.mxu0 0.0
    %228 = vmatpush2.msra.mxu0 0.0
    %229 = vmatprep.subr.mxu0 0.0
    %230 = vmatpush2.msra.mxu0 0.0
    %231 = vmatprep.subr.mxu0 0.0
    %232 = vmatpush2.msra.mxu0 0.0
    %233 = vmatprep.subr.mxu0 0.0
    %234 = vmatpush2.msra.mxu0 0.0
    %235 = vmatprep.subr.mxu0 0.0
    %236 = vmatpush2.msra.mxu0 0.0
    %237 = vmatprep.subr.mxu0 0.0
    %238 = vmatpush2.msra.mxu0 0.0
    %239 = vmatprep.subr.mxu0 0.0
    %240 = vmatpush2.msra.mxu0 0.0
    %241 = vmatprep.subr.mxu0 0.0
    %242 = vmatpush2.msra.mxu0 0.0
    %243 = vmatprep.subr.mxu0 0.0
    %244 = vmatpush2.msra.mxu0 0.0
    %245 = vmatprep.subr.mxu0 0.0
    %246 = vmatpush2.msra.mxu0 0.0
    %247 = vmatprep.mubr.f32.mxu0 0.0
    %248 = vmatmul.mubr.f32.gmra.mxu0 %v181
    %v249 = vpop.f32.mrf.mxu0
    %v250 = vadd.f32 %v178, %v249
    %v251 = vpop.f32.mrf.mxu0
    %252 = vdwg.mxu0
    %v253 = vmax.f32 %v250, 0.0
    %v254 = vsel %vm94, %v253, 0.0
    %255 = vadd.xlane.f32.xlu0 %v254
    %v256 = vpop.xlane.xlu0 %255
    %v257 = vmul.f32 %v256, %v98
    %v258 = vsub.f32 %v253, %v257
    %v259 = vmul.f32 %v258, %v258
    %v260 = vsel %vm94, %v259, 0.0
    %261 = vadd.xlane.f32.xlu0 %v260
    %v262 = vpop.xlane.xlu0 %261
    %v263 = vmul.f32 %v262, %v98
    %v264 = vadd.f32 %v263, 1e-05
    %v265 = vrsqrt.pop %v264
    %v266 = vmul.f32 %v258, %v265
    %268 = vrot.lane.b32.xlu0 %v253, 96
    %v269 = vpop.permute.xlu0 %268
    %v271 = vsel %vm94, %v269, 0.0
    %272 = vadd.xlane.f32.xlu0 %v271
    %v273 = vpop.xlane.xlu0 %272
    %v274 = vmul.f32 %v273, %v98
    %v275 = vsub.f32 %v253, %v274
    %v276 = vmul.f32 %v275, %v275
    %278 = vrot.lane.b32.xlu0 %v276, 96
    %v279 = vpop.permute.xlu0 %278
    %v281 = vsel %vm94, %v279, 0.0
    %282 = vadd.xlane.f32.xlu0 %v281
    %v283 = vpop.xlane.xlu0 %282
    %v284 = vmul.f32 %v283, %v98
    %v285 = vadd.f32 %v284, 1e-05
    %v286 = vrsqrt.pop %v285
    %v287 = vmul.f32 %v275, %v286
    %288 = vrot.lane.b32.xlu0 %v253, 64
    %v289 = vpop.permute.xlu0 %288
    %v291 = vsel %vm94, %v289, 0.0
    %292 = vadd.xlane.f32.xlu0 %v291
    %v293 = vpop.xlane.xlu0 %292
    %v294 = vmul.f32 %v293, %v98
    %v295 = vsub.f32 %v253, %v294
    %v296 = vmul.f32 %v295, %v295
    %298 = vrot.lane.b32.xlu0 %v296, 64
    %v299 = vpop.permute.xlu0 %298
    %v301 = vsel %vm94, %v299, 0.0
    %302 = vadd.xlane.f32.xlu0 %v301
    %v303 = vpop.xlane.xlu0 %302
    %v304 = vmul.f32 %v303, %v98
    %v305 = vadd.f32 %v304, 1e-05
    %v306 = vrsqrt.pop %v305
    %v307 = vmul.f32 %v295, %v306
    %v308 = vsel %vm94, %v266, %v287
    %v309 = vsel %vm151, %v308, %v307
    %v310 = vlaneseq
    %v311 = vshrl.u32 %v310, 7
    %v312 = vsub.s32 3, %v311
    %v313 = vrot.slane %v87, %v312
    %v314 = vmul.f32 %v309, %v313
    %v315 = vlaneseq
    %v316 = vshrl.u32 %v315, 7
    %v317 = vsub.s32 4, %v316
    %v318 = vrot.slane %v87, %v317
    %v319 = vadd.f32 %v314, %v318
    %v320 = vld [vmem:[#allocation4] sm:$0xff]
    %v321 = vld [vmem:[#allocation4 + $0x8] sm:$0xff]
    %v322 = vld [vmem:[#allocation4 + $0x10] sm:$0xff]
    %v323 = vld [vmem:[#allocation4 + $0x18] sm:$0xff]
    %v324 = vld [vmem:[#allocation4 + $0x20] sm:$0xff]
    %v325 = vld [vmem:[#allocation4 + $0x28] sm:$0xff]
    %v326 = vld [vmem:[#allocation4 + $0x30] sm:$0xff]
    %v327 = vld [vmem:[#allocation4 + $0x38] sm:$0xff]
    %v328 = vld [vmem:[#allocation4 + $0x40] sm:$0xff]
    %v329 = vld [vmem:[#allocation4 + $0x48] sm:$0xff]
    %v330 = vld [vmem:[#allocation4 + $0x50] sm:$0xff]
    %v331 = vld [vmem:[#allocation4 + $0x58] sm:$0xff]
    %v332 = vlaneseq
    %v333 = vshrl.u32 %v332, 7
    %v334 = vsub.s32 5, %v333
    %v335 = vrot.slane %v87, %v334
    %v337 = vsel %vm179, %v319, 0
    %339 = vmatprep.subr.mxu0 0.0
    %340 = vmatpush1.msra.mxu0 0.0
    %341 = vmatprep.subr.mxu0 0.0
    %342 = vmatpush1.msra.mxu0 0.0
    %343 = vmatprep.subr.mxu0 0.0
    %344 = vmatpush1.msra.mxu0 0.0
    %345 = vmatprep.subr.mxu0 0.0
    %346 = vmatpush1.msra.mxu0 0.0
    %347 = vmatprep.subr.mxu0 0.0
    %348 = vmatpush1.msra.mxu0 %v331
    %349 = vmatprep.subr.mxu0 0.0
    %350 = vmatpush1.msra.mxu0 %v330
    %351 = vmatprep.subr.mxu0 0.0
    %352 = vmatpush1.msra.mxu0 %v329
    %353 = vmatprep.subr.mxu0 0.0
    %354 = vmatpush1.msra.mxu0 %v328
    %355 = vmatprep.subr.mxu0 0.0
    %356 = vmatpush1.msra.mxu0 %v327
    %357 = vmatprep.subr.mxu0 0.0
    %358 = vmatpush1.msra.mxu0 %v326
    %359 = vmatprep.subr.mxu0 0.0
    %360 = vmatpush1.msra.mxu0 %v325
    %361 = vmatprep.subr.mxu0 0.0
    %362 = vmatpush1.msra.mxu0 %v324
    %363 = vmatprep.subr.mxu0 0.0
    %364 = vmatpush1.msra.mxu0 %v323
    %365 = vmatprep.subr.mxu0 0.0
    %366 = vmatpush1.msra.mxu0 %v322
    %367 = vmatprep.subr.mxu0 0.0
    %368 = vmatpush1.msra.mxu0 %v321
    %369 = vmatprep.subr.mxu0 0.0
    %370 = vmatpush1.msra.mxu0 %v320
    %371 = vmatprep.subr.mxu0 0.0
    %372 = vmatpush2.msra.mxu0 0.0
    %373 = vmatprep.subr.mxu0 0.0
    %374 = vmatpush2.msra.mxu0 0.0
    %375 = vmatprep.subr.mxu0 0.0
    %376 = vmatpush2.msra.mxu0 0.0
    %377 = vmatprep.subr.mxu0 0.0
    %378 = vmatpush2.msra.mxu0 0.0
    %379 = vmatprep.subr.mxu0 0.0
    %380 = vmatpush2.msra.mxu0 0.0
    %381 = vmatprep.subr.mxu0 0.0
    %382 = vmatpush2.msra.mxu0 0.0
    %383 = vmatprep.subr.mxu0 0.0
    %384 = vmatpush2.msra.mxu0 0.0
    %385 = vmatprep.subr.mxu0 0.0
    %386 = vmatpush2.msra.mxu0 0.0
    %387 = vmatprep.subr.mxu0 0.0
    %388 = vmatpush2.msra.mxu0 0.0
    %389 = vmatprep.subr.mxu0 0.0
    %390 = vmatpush2.msra.mxu0 0.0
    %391 = vmatprep.subr.mxu0 0.0
    %392 = vmatpush2.msra.mxu0 0.0
    %393 = vmatprep.subr.mxu0 0.0
    %394 = vmatpush2.msra.mxu0 0.0
    %395 = vmatprep.subr.mxu0 0.0
    %396 = vmatpush2.msra.mxu0 0.0
    %397 = vmatprep.subr.mxu0 0.0
    %398 = vmatpush2.msra.mxu0 0.0
    %399 = vmatprep.subr.mxu0 0.0
    %400 = vmatpush2.msra.mxu0 0.0
    %401 = vmatprep.subr.mxu0 0.0
    %402 = vmatpush2.msra.mxu0 0.0
    %403 = vmatprep.mubr.f32.mxu0 0.0
    %404 = vmatmul.mubr.f32.gmra.mxu0 %v337
    %v405 = vpop.f32.mrf.mxu0
    %v406 = vadd.f32 %v335, %v405
    %v407 = vpop.f32.mrf.mxu0
    %408 = vdwg.mxu0
    %v409 = vmax.f32 %v406, 0.0
    %v410 = vsel %vm94, %v409, 0.0
    %411 = vadd.xlane.f32.xlu0 %v410
    %v412 = vpop.xlane.xlu0 %411
    %v413 = vmul.f32 %v412, %v98
    %v414 = vsub.f32 %v409, %v413
    %v415 = vmul.f32 %v414, %v414
    %v416 = vsel %vm94, %v415, 0.0
    %417 = vadd.xlane.f32.xlu0 %v416
    %v418 = vpop.xlane.xlu0 %417
    %v419 = vmul.f32 %v418, %v98
    %v420 = vadd.f32 %v419, 1e-05
    %v421 = vrsqrt.pop %v420
    %v422 = vmul.f32 %v414, %v421
    %424 = vrot.lane.b32.xlu0 %v409, 96
    %v425 = vpop.permute.xlu0 %424
    %v427 = vsel %vm94, %v425, 0.0
    %428 = vadd.xlane.f32.xlu0 %v427
    %v429 = vpop.xlane.xlu0 %428
    %v430 = vmul.f32 %v429, %v98
    %v431 = vsub.f32 %v409, %v430
    %v432 = vmul.f32 %v431, %v431
    %434 = vrot.lane.b32.xlu0 %v432, 96
    %v435 = vpop.permute.xlu0 %434
    %v437 = vsel %vm94, %v435, 0.0
    %438 = vadd.xlane.f32.xlu0 %v437
    %v439 = vpop.xlane.xlu0 %438
    %v440 = vmul.f32 %v439, %v98
    %v441 = vadd.f32 %v440, 1e-05
    %v442 = vrsqrt.pop %v441
    %v443 = vmul.f32 %v431, %v442
    %444 = vrot.lane.b32.xlu0 %v409, 64
    %v445 = vpop.permute.xlu0 %444
    %v447 = vsel %vm94, %v445, 0.0
    %448 = vadd.xlane.f32.xlu0 %v447
    %v449 = vpop.xlane.xlu0 %448
    %v450 = vmul.f32 %v449, %v98
    %v451 = vsub.f32 %v409, %v450
    %v452 = vmul.f32 %v451, %v451
    %454 = vrot.lane.b32.xlu0 %v452, 64
    %v455 = vpop.permute.xlu0 %454
    %v457 = vsel %vm94, %v455, 0.0
    %458 = vadd.xlane.f32.xlu0 %v457
    %v459 = vpop.xlane.xlu0 %458
    %v460 = vmul.f32 %v459, %v98
    %v461 = vadd.f32 %v460, 1e-05
    %v462 = vrsqrt.pop %v461
    %v463 = vmul.f32 %v451, %v462
    %v464 = vsel %vm94, %v422, %v443
    %v465 = vsel %vm151, %v464, %v463
    %v466 = vlaneseq
    %v467 = vshrl.u32 %v466, 7
    %v468 = vsub.s32 6, %v467
    %v469 = vrot.slane %v87, %v468
    %v470 = vmul.f32 %v465, %v469
    %v471 = vlaneseq
    %v472 = vshrl.u32 %v471, 7
    %v473 = vsub.s32 7, %v472
    %v474 = vrot.slane %v87, %v473
    %v475 = vadd.f32 %v470, %v474
    %v476 = vld [vmem:[%s5] sm:$0xff]
    %v477 = vld [vmem:[%s5 + $0x8] sm:$0xff]
    %v478 = vld [vmem:[%s5 + $0x10] sm:$0xff]
    %v479 = vld [vmem:[%s5 + $0x18] sm:$0xff]
    %v480 = vld [vmem:[%s5 + $0x20] sm:$0xff]
    %v481 = vld [vmem:[%s5 + $0x28] sm:$0xff]
    %v482 = vld [vmem:[%s5 + $0x30] sm:$0xff]
    %v483 = vld [vmem:[%s5 + $0x38] sm:$0xff]
    %v484 = vld [vmem:[%s5 + $0x40] sm:$0xff]
    %v485 = vld [vmem:[%s5 + $0x48] sm:$0xff]
    %v486 = vld [vmem:[%s5 + $0x50] sm:$0xff]
    %v487 = vld [vmem:[%s5 + $0x58] sm:$0xff]
    %v488 = vld [vmem:[%s5 + $0x60] sm:$0xff]
    %v489 = vld [vmem:[%s5 + $0x68] sm:$0xff]
    %v490 = vld [vmem:[%s5 + $0x70] sm:$0xff]
    %v491 = vld [vmem:[%s5 + $0x78] sm:$0xff]
    %v492 = vld [vmem:[%s5 + $0x80] sm:$0xff]
    %v493 = vld [vmem:[%s5 + $0x88] sm:$0xff]
    %v494 = vld [vmem:[%s5 + $0x90] sm:$0xff]
    %v495 = vld [vmem:[%s5 + $0x98] sm:$0xff]
    %v496 = vld [vmem:[%s5 + $0xa0] sm:$0xff]
    %v497 = vld [vmem:[%s5 + $0xa8] sm:$0xff]
    %v498 = vld [vmem:[%s5 + $0xb0] sm:$0xff]
    %v499 = vld [vmem:[%s5 + $0xb8] sm:$0xff]
    %v500 = vld [vmem:[%s5 + $0xc0] sm:$0xff]
    %v501 = vld [vmem:[%s5 + $0xc8] sm:$0xff]
    %v502 = vld [vmem:[%s5 + $0xd0] sm:$0xff]
    %v503 = vld [vmem:[%s5 + $0xd8] sm:$0xff]
    %v504 = vld [vmem:[%s5 + $0xe0] sm:$0xff]
    %v505 = vld [vmem:[%s5 + $0xe8] sm:$0xff]
    %v506 = vld [vmem:[%s5 + $0xf0] sm:$0xff]
    %v507 = vld [vmem:[%s5 + $0xf8] sm:$0xff]
    %v508 = vld [vmem:[%s5 + $0x100] sm:$0xff]
    %v509 = vld [vmem:[%s5 + $0x108] sm:$0xff]
    %v510 = vld [vmem:[%s5 + $0x110] sm:$0xff]
    %v511 = vld [vmem:[%s5 + $0x118] sm:$0xff]
    %v513 = vsel %vm179, %v475, 0
    %515 = vmatprep.subr.mxu0 0.0
    %516 = vmatpush1.msra.mxu0 0.0
    %517 = vmatprep.subr.mxu0 0.0
    %518 = vmatpush1.msra.mxu0 0.0
    %519 = vmatprep.subr.mxu0 0.0
    %520 = vmatpush1.msra.mxu0 0.0
    %521 = vmatprep.subr.mxu0 0.0
    %522 = vmatpush1.msra.mxu0 0.0
    %523 = vmatprep.subr.mxu0 %v510
    %524 = vmatpush1.msra.mxu0 %v509
    %525 = vmatprep.subr.mxu0 %v507
    %526 = vmatpush1.msra.mxu0 %v506
    %527 = vmatprep.subr.mxu0 %v504
    %528 = vmatpush1.msra.mxu0 %v503
    %529 = vmatprep.subr.mxu0 %v501
    %530 = vmatpush1.msra.mxu0 %v500
    %531 = vmatprep.subr.mxu0 %v498
    %532 = vmatpush1.msra.mxu0 %v497
    %533 = vmatprep.subr.mxu0 %v495
    %534 = vmatpush1.msra.mxu0 %v494
    %535 = vmatprep.subr.mxu0 %v492
    %536 = vmatpush1.msra.mxu0 %v491
    %537 = vmatprep.subr.mxu0 %v489
    %538 = vmatpush1.msra.mxu0 %v488
    %539 = vmatprep.subr.mxu0 %v486
    %540 = vmatpush1.msra.mxu0 %v485
    %541 = vmatprep.subr.mxu0 %v483
    %542 = vmatpush1.msra.mxu0 %v482
    %543 = vmatprep.subr.mxu0 %v480
    %544 = vmatpush1.msra.mxu0 %v479
    %545 = vmatprep.subr.mxu0 %v477
    %546 = vmatpush1.msra.mxu0 %v476
    %547 = vmatprep.subr.mxu0 0.0
    %548 = vmatpush2.msra.mxu0 0.0
    %549 = vmatprep.subr.mxu0 0.0
    %550 = vmatpush2.msra.mxu0 0.0
    %551 = vmatprep.subr.mxu0 0.0
    %552 = vmatpush2.msra.mxu0 0.0
    %553 = vmatprep.subr.mxu0 0.0
    %554 = vmatpush2.msra.mxu0 0.0
    %555 = vmatprep.subr.mxu0 0.0
    %556 = vmatpush2.msra.mxu0 0.0
    %557 = vmatprep.subr.mxu0 0.0
    %558 = vmatpush2.msra.mxu0 0.0
    %559 = vmatprep.subr.mxu0 0.0
    %560 = vmatpush2.msra.mxu0 0.0
    %561 = vmatprep.subr.mxu0 0.0
    %562 = vmatpush2.msra.mxu0 0.0
    %563 = vmatprep.subr.mxu0 0.0
    %564 = vmatpush2.msra.mxu0 0.0
    %565 = vmatprep.subr.mxu0 0.0
    %566 = vmatpush2.msra.mxu0 0.0
    %567 = vmatprep.subr.mxu0 0.0
    %568 = vmatpush2.msra.mxu0 0.0
    %569 = vmatprep.subr.mxu0 0.0
    %570 = vmatpush2.msra.mxu0 0.0
    %571 = vmatprep.subr.mxu0 0.0
    %572 = vmatpush2.msra.mxu0 0.0
    %573 = vmatprep.subr.mxu0 0.0
    %574 = vmatpush2.msra.mxu0 0.0
    %575 = vmatprep.subr.mxu0 0.0
    %576 = vmatpush2.msra.mxu0 0.0
    %577 = vmatprep.subr.mxu0 0.0
    %578 = vmatpush2.msra.mxu0 0.0
    %579 = vmatprep.mubr.f32.mxu0 0.0
    %580 = vmatmul.mubr.f32.gmra.mxu0 %v513
    %v581 = vpop.f32.mrf.mxu0
    %v582 = vadd.f32 0.0, %v581
    %v583 = vpop.f32.mrf.mxu0
    %v584 = vadd.f32 0.0, %v583
    %585 = vdwg.mxu0
    %586 = vmatprep.subr.mxu0 0.0
    %587 = vmatpush1.msra.mxu0 0.0
    %588 = vmatprep.subr.mxu0 0.0
    %589 = vmatpush1.msra.mxu0 0.0
    %590 = vmatprep.subr.mxu0 0.0
    %591 = vmatpush1.msra.mxu0 0.0
    %592 = vmatprep.subr.mxu0 0.0
    %593 = vmatpush1.msra.mxu0 0.0
    %594 = vmatprep.subr.mxu0 0.0
    %595 = vmatpush1.msra.mxu0 %v511
    %596 = vmatprep.subr.mxu0 0.0
    %597 = vmatpush1.msra.mxu0 %v508
    %598 = vmatprep.subr.mxu0 0.0
    %599 = vmatpush1.msra.mxu0 %v505
    %600 = vmatprep.subr.mxu0 0.0
    %601 = vmatpush1.msra.mxu0 %v502
    %602 = vmatprep.subr.mxu0 0.0
    %603 = vmatpush1.msra.mxu0 %v499
    %604 = vmatprep.subr.mxu0 0.0
    %605 = vmatpush1.msra.mxu0 %v496
    %606 = vmatprep.subr.mxu0 0.0
    %607 = vmatpush1.msra.mxu0 %v493
    %608 = vmatprep.subr.mxu0 0.0
    %609 = vmatpush1.msra.mxu0 %v490
    %610 = vmatprep.subr.mxu0 0.0
    %611 = vmatpush1.msra.mxu0 %v487
    %612 = vmatprep.subr.mxu0 0.0
    %613 = vmatpush1.msra.mxu0 %v484
    %614 = vmatprep.subr.mxu0 0.0
    %615 = vmatpush1.msra.mxu0 %v481
    %616 = vmatprep.subr.mxu0 0.0
    %617 = vmatpush1.msra.mxu0 %v478
    %618 = vmatprep.subr.mxu0 0.0
    %619 = vmatpush2.msra.mxu0 0.0
    %620 = vmatprep.subr.mxu0 0.0
    %621 = vmatpush2.msra.mxu0 0.0
    %622 = vmatprep.subr.mxu0 0.0
    %623 = vmatpush2.msra.mxu0 0.0
    %624 = vmatprep.subr.mxu0 0.0
    %625 = vmatpush2.msra.mxu0 0.0
    %626 = vmatprep.subr.mxu0 0.0
    %627 = vmatpush2.msra.mxu0 0.0
    %628 = vmatprep.subr.mxu0 0.0
    %629 = vmatpush2.msra.mxu0 0.0
    %630 = vmatprep.subr.mxu0 0.0
    %631 = vmatpush2.msra.mxu0 0.0
    %632 = vmatprep.subr.mxu0 0.0
    %633 = vmatpush2.msra.mxu0 0.0
    %634 = vmatprep.subr.mxu0 0.0
    %635 = vmatpush2.msra.mxu0 0.0
    %636 = vmatprep.subr.mxu0 0.0
    %637 = vmatpush2.msra.mxu0 0.0
    %638 = vmatprep.subr.mxu0 0.0
    %639 = vmatpush2.msra.mxu0 0.0
    %640 = vmatprep.subr.mxu0 0.0
    %641 = vmatpush2.msra.mxu0 0.0
    %642 = vmatprep.subr.mxu0 0.0
    %643 = vmatpush2.msra.mxu0 0.0
    %644 = vmatprep.subr.mxu0 0.0
    %645 = vmatpush2.msra.mxu0 0.0
    %646 = vmatprep.subr.mxu0 0.0
    %647 = vmatpush2.msra.mxu0 0.0
    %648 = vmatprep.subr.mxu0 0.0
    %649 = vmatpush2.msra.mxu0 0.0
    %650 = vmatprep.mubr.f32.mxu0 0.0
    %651 = vmatmul.mubr.f32.gmra.mxu0 %v513
    %v652 = vpop.f32.mrf.mxu0
    %v653 = vadd.f32 0.0, %v652
    %v654 = vpop.f32.mrf.mxu0
    %655 = vdwg.mxu0
    %v656 = vld [vmem:[#allocation6] sm:$0xff]
    %v657 = vld [vmem:[#allocation6 + $0x8] sm:$0xff]
    %v658 = vld [vmem:[#allocation6 + $0x10] sm:$0xff]
    %v659 = vld [vmem:[#allocation6 + $0x18] sm:$0xff]
    %v660 = vld [vmem:[#allocation6 + $0x20] sm:$0xff]
    %v661 = vld [vmem:[#allocation6 + $0x28] sm:$0xff]
    %v662 = vld [vmem:[#allocation6 + $0x30] sm:$0xff]
    %v663 = vld [vmem:[#allocation6 + $0x38] sm:$0xff]
    %v664 = vld [vmem:[#allocation6 + $0x40] sm:$0xff]
    %v665 = vld [vmem:[#allocation6 + $0x48] sm:$0xff]
    %v666 = vld [vmem:[#allocation6 + $0x50] sm:$0xff]
    %v667 = vld [vmem:[#allocation6 + $0x58] sm:$0xff]
    %v668 = vld [vmem:[#allocation6 + $0x60] sm:$0xff]
    %v669 = vld [vmem:[#allocation6 + $0x68] sm:$0xff]
    %v670 = vld [vmem:[#allocation6 + $0x70] sm:$0xff]
    %v671 = vld [vmem:[#allocation6 + $0x78] sm:$0xff]
    %v672 = vld [vmem:[#allocation6 + $0x80] sm:$0xff]
    %v673 = vld [vmem:[#allocation6 + $0x88] sm:$0xff]
    %v674 = vld [vmem:[#allocation6 + $0x90] sm:$0xff]
    %v675 = vld [vmem:[#allocation6 + $0x98] sm:$0xff]
    %v676 = vld [vmem:[#allocation6 + $0xa0] sm:$0xff]
    %v677 = vld [vmem:[#allocation6 + $0xa8] sm:$0xff]
    %v678 = vld [vmem:[#allocation6 + $0xb0] sm:$0xff]
    %v679 = vld [vmem:[#allocation6 + $0xb8] sm:$0xff]
    %v680 = vld [vmem:[#allocation6 + $0xc0] sm:$0xff]
    %v681 = vld [vmem:[#allocation6 + $0xc8] sm:$0xff]
    %v682 = vld [vmem:[#allocation6 + $0xd0] sm:$0xff]
    %v683 = vld [vmem:[#allocation6 + $0xd8] sm:$0xff]
    %v684 = vld [vmem:[#allocation6 + $0xe0] sm:$0xff]
    %v685 = vld [vmem:[#allocation6 + $0xe8] sm:$0xff]
    %v686 = vld [vmem:[#allocation6 + $0xf0] sm:$0xff]
    %v687 = vld [vmem:[#allocation6 + $0xf8] sm:$0xff]
    %v688 = vld [vmem:[#allocation6 + $0x100] sm:$0xff]
    %v689 = vld [vmem:[#allocation6 + $0x108] sm:$0xff]
    %v690 = vld [vmem:[#allocation6 + $0x110] sm:$0xff]
    %v691 = vld [vmem:[#allocation6 + $0x118] sm:$0xff]
    %v693 = vsel %vm179, %v93, 0
    %695 = vmatprep.subr.mxu0 0.0
    %696 = vmatpush1.msra.mxu0 0.0
    %697 = vmatprep.subr.mxu0 0.0
    %698 = vmatpush1.msra.mxu0 0.0
    %699 = vmatprep.subr.mxu0 0.0
    %700 = vmatpush1.msra.mxu0 0.0
    %701 = vmatprep.subr.mxu0 0.0
    %702 = vmatpush1.msra.mxu0 0.0
    %703 = vmatprep.subr.mxu0 %v690
    %704 = vmatpush1.msra.mxu0 %v689
    %705 = vmatprep.subr.mxu0 %v687
    %706 = vmatpush1.msra.mxu0 %v686
    %707 = vmatprep.subr.mxu0 %v684
    %708 = vmatpush1.msra.mxu0 %v683
    %709 = vmatprep.subr.mxu0 %v681
    %710 = vmatpush1.msra.mxu0 %v680
    %711 = vmatprep.subr.mxu0 %v678
    %712 = vmatpush1.msra.mxu0 %v677
    %713 = vmatprep.subr.mxu0 %v675
    %714 = vmatpush1.msra.mxu0 %v674
    %715 = vmatprep.subr.mxu0 %v672
    %716 = vmatpush1.msra.mxu0 %v671
    %717 = vmatprep.subr.mxu0 %v669
    %718 = vmatpush1.msra.mxu0 %v668
    %719 = vmatprep.subr.mxu0 %v666
    %720 = vmatpush1.msra.mxu0 %v665
    %721 = vmatprep.subr.mxu0 %v663
    %722 = vmatpush1.msra.mxu0 %v662
    %723 = vmatprep.subr.mxu0 %v660
    %724 = vmatpush1.msra.mxu0 %v659
    %725 = vmatprep.subr.mxu0 %v657
    %726 = vmatpush1.msra.mxu0 %v656
    %727 = vmatprep.subr.mxu0 0.0
    %728 = vmatpush2.msra.mxu0 0.0
    %729 = vmatprep.subr.mxu0 0.0
    %730 = vmatpush2.msra.mxu0 0.0
    %731 = vmatprep.subr.mxu0 0.0
    %732 = vmatpush2.msra.mxu0 0.0
    %733 = vmatprep.subr.mxu0 0.0
    %734 = vmatpush2.msra.mxu0 0.0
    %735 = vmatprep.subr.mxu0 0.0
    %736 = vmatpush2.msra.mxu0 0.0
    %737 = vmatprep.subr.mxu0 0.0
    %738 = vmatpush2.msra.mxu0 0.0
    %739 = vmatprep.subr.mxu0 0.0
    %740 = vmatpush2.msra.mxu0 0.0
    %741 = vmatprep.subr.mxu0 0.0
    %742 = vmatpush2.msra.mxu0 0.0
    %743 = vmatprep.subr.mxu0 0.0
    %744 = vmatpush2.msra.mxu0 0.0
    %745 = vmatprep.subr.mxu0 0.0
    %746 = vmatpush2.msra.mxu0 0.0
    %747 = vmatprep.subr.mxu0 0.0
    %748 = vmatpush2.msra.mxu0 0.0
    %749 = vmatprep.subr.mxu0 0.0
    %750 = vmatpush2.msra.mxu0 0.0
    %751 = vmatprep.subr.mxu0 0.0
    %752 = vmatpush2.msra.mxu0 0.0
    %753 = vmatprep.subr.mxu0 0.0
    %754 = vmatpush2.msra.mxu0 0.0
    %755 = vmatprep.subr.mxu0 0.0
    %756 = vmatpush2.msra.mxu0 0.0
    %757 = vmatprep.subr.mxu0 0.0
    %758 = vmatpush2.msra.mxu0 0.0
    %759 = vmatprep.mubr.f32.mxu0 0.0
    %760 = vmatmul.mubr.f32.gmra.mxu0 %v693
    %v761 = vpop.f32.mrf.mxu0
    %v762 = vadd.f32 0.0, %v761
    %v763 = vpop.f32.mrf.mxu0
    %v764 = vadd.f32 0.0, %v763
    %765 = vdwg.mxu0
    %766 = vmatprep.subr.mxu0 0.0
    %767 = vmatpush1.msra.mxu0 0.0
    %768 = vmatprep.subr.mxu0 0.0
    %769 = vmatpush1.msra.mxu0 0.0
    %770 = vmatprep.subr.mxu0 0.0
    %771 = vmatpush1.msra.mxu0 0.0
    %772 = vmatprep.subr.mxu0 0.0
    %773 = vmatpush1.msra.mxu0 0.0
    %774 = vmatprep.subr.mxu0 0.0
    %775 = vmatpush1.msra.mxu0 %v691
    %776 = vmatprep.subr.mxu0 0.0
    %777 = vmatpush1.msra.mxu0 %v688
    %778 = vmatprep.subr.mxu0 0.0
    %779 = vmatpush1.msra.mxu0 %v685
    %780 = vmatprep.subr.mxu0 0.0
    %781 = vmatpush1.msra.mxu0 %v682
    %782 = vmatprep.subr.mxu0 0.0
    %783 = vmatpush1.msra.mxu0 %v679
    %784 = vmatprep.subr.mxu0 0.0
    %785 = vmatpush1.msra.mxu0 %v676
    %786 = vmatprep.subr.mxu0 0.0
    %787 = vmatpush1.msra.mxu0 %v673
    %788 = vmatprep.subr.mxu0 0.0
    %789 = vmatpush1.msra.mxu0 %v670
    %790 = vmatprep.subr.mxu0 0.0
    %791 = vmatpush1.msra.mxu0 %v667
    %792 = vmatprep.subr.mxu0 0.0
    %793 = vmatpush1.msra.mxu0 %v664
    %794 = vmatprep.subr.mxu0 0.0
    %795 = vmatpush1.msra.mxu0 %v661
    %796 = vmatprep.subr.mxu0 0.0
    %797 = vmatpush1.msra.mxu0 %v658
    %798 = vmatprep.subr.mxu0 0.0
    %799 = vmatpush2.msra.mxu0 0.0
    %800 = vmatprep.subr.mxu0 0.0
    %801 = vmatpush2.msra.mxu0 0.0
    %802 = vmatprep.subr.mxu0 0.0
    %803 = vmatpush2.msra.mxu0 0.0
    %804 = vmatprep.subr.mxu0 0.0
    %805 = vmatpush2.msra.mxu0 0.0
    %806 = vmatprep.subr.mxu0 0.0
    %807 = vmatpush2.msra.mxu0 0.0
    %808 = vmatprep.subr.mxu0 0.0
    %809 = vmatpush2.msra.mxu0 0.0
    %810 = vmatprep.subr.mxu0 0.0
    %811 = vmatpush2.msra.mxu0 0.0
    %812 = vmatprep.subr.mxu0 0.0
    %813 = vmatpush2.msra.mxu0 0.0
    %814 = vmatprep.subr.mxu0 0.0
    %815 = vmatpush2.msra.mxu0 0.0
    %816 = vmatprep.subr.mxu0 0.0
    %817 = vmatpush2.msra.mxu0 0.0
    %818 = vmatprep.subr.mxu0 0.0
    %819 = vmatpush2.msra.mxu0 0.0
    %820 = vmatprep.subr.mxu0 0.0
    %821 = vmatpush2.msra.mxu0 0.0
    %822 = vmatprep.subr.mxu0 0.0
    %823 = vmatpush2.msra.mxu0 0.0
    %824 = vmatprep.subr.mxu0 0.0
    %825 = vmatpush2.msra.mxu0 0.0
    %826 = vmatprep.subr.mxu0 0.0
    %827 = vmatpush2.msra.mxu0 0.0
    %828 = vmatprep.subr.mxu0 0.0
    %829 = vmatpush2.msra.mxu0 0.0
    %830 = vmatprep.mubr.f32.mxu0 0.0
    %831 = vmatmul.mubr.f32.gmra.mxu0 %v693
    %v832 = vpop.f32.mrf.mxu0
    %v833 = vadd.f32 0.0, %v832
    %v834 = vpop.f32.mrf.mxu0
    %835 = vdwg.mxu0
    %v836 = vlaneseq
    %v837 = vshrl.u32 %v836, 7
    %v838 = vsub.s32 0, %v837
    %v839 = vrot.slane %v88, %v838
    %v840 = vadd.f32 %v582, %v839
    %v841 = vadd.f32 %v840, %v762
    %v842 = vlaneseq
    %v843 = vshrl.u32 %v842, 7
    %v844 = vsub.s32 3, %v843
    %v845 = vrot.slane %v88, %v844
    %v846 = vadd.f32 %v841, %v845
    %v847 = vxor.u32 %v846, 2147483648
    %v848 = vmul.f32 %v847, 1.442695
    %v849 = vpow.pop %v848
    %v850 = vadd.f32 %v849, 1.0
    %v851 = vrcp.pop %v850
    %v852 = vmul.f32 1.0, %v851
    %v853 = vlaneseq
    %v854 = vshrl.u32 %v853, 7
    %v855 = vsub.s32 1, %v854
    %v856 = vrot.slane %v88, %v855
    %858 = vrot.lane.b32.xlu0 %v856, 96
    %v859 = vpop.permute.xlu0 %858
    %v861 = vadd.f32 %v582, %v859
    %v862 = vadd.f32 %v584, %v859
    %v863 = vadd.f32 %v861, %v762
    %v864 = vadd.f32 %v862, %v764
    %v865 = vlaneseq
    %v866 = vshrl.u32 %v865, 7
    %v867 = vsub.s32 4, %v866
    %v868 = vrot.slane %v88, %v867
    %870 = vrot.lane.b32.xlu0 %v868, 96
    %v871 = vpop.permute.xlu0 %870
    %v873 = vadd.f32 %v863, %v871
    %v874 = vadd.f32 %v864, %v871
    %v875 = vxor.u32 %v873, 2147483648
    %v876 = vxor.u32 %v874, 2147483648
    %v877 = vmul.f32 %v875, 1.442695
    %v878 = vpow.pop %v877
    %v879 = vmul.f32 %v876, 1.442695
    %v880 = vpow.pop %v879
    %v881 = vadd.f32 %v878, 1.0
    %v882 = vadd.f32 %v880, 1.0
    %v883 = vrcp.pop %v881
    %v884 = vmul.f32 1.0, %v883
    %v885 = vrcp.pop %v882
    %v886 = vmul.f32 1.0, %v885
    %v887 = vlaneseq
    %v888 = vshrl.u32 %v887, 7
    %v889 = vsub.s32 2, %v888
    %v890 = vrot.slane %v88, %v889
    %892 = vrot.lane.b32.xlu0 %v890, 64
    %v893 = vpop.permute.xlu0 %892
    %v895 = vadd.f32 %v584, %v893
    %v896 = vadd.f32 %v653, %v893
    %v897 = vlaneseq
    %v898 = vshrl.u32 %v897, 7
    %v899 = vsub.s32 5, %v898
    %v900 = vrot.slane %v88, %v899
    %902 = vrot.lane.b32.xlu0 %v900, 64
    %v903 = vpop.permute.xlu0 %902
    %v905 = vadd.f32 %v764, %v903
    %v906 = vadd.f32 %v833, %v903
    %909 = vrot.lane.b32.xlu0 %v905, 64
    %v910 = vpop.permute.xlu0 %909
    %911 = vrot.lane.b32.xlu0 %v906, 64
    %v912 = vpop.permute.xlu0 %911
    %v913 = vsel %vm151, %v910, %v912
    %v915 = vmul.f32 %v852, %v913
    %917 = vrot.lane.b32.xlu0 %v915, 64
    %v918 = vpop.permute.xlu0 %917
    %v920 = vadd.f32 %v895, %v918
    %v921 = vadd.f32 %v896, %v918
    %v922 = vtanh.pop %v920
    %v923 = vtanh.pop %v921
    %v924 = vsub.f32 1.0, %v884
    %v925 = vsub.f32 1.0, %v886
    %928 = vrot.lane.b32.xlu0 %v922, 32
    %v929 = vpop.permute.xlu0 %928
    %930 = vrot.lane.b32.xlu0 %v923, 32
    %v931 = vpop.permute.xlu0 %930
    %v932 = vsel %vm94, %v929, %v931
    %v935 = vmul.f32 %v924, %v929
    %v936 = vmul.f32 %v925, %v932
    %937 = vrot.lane.b32.xlu0 %v93, 96
    %v938 = vpop.permute.xlu0 %937
    %v940 = vmul.f32 %v884, %v938
    %v941 = vmul.f32 %v886, %v938
    %v942 = vadd.f32 %v935, %v940
    %v943 = vadd.f32 %v936, %v941
    %945 = vrot.lane.b32.xlu0 %v942, 32
    %v946 = vpop.permute.xlu0 %945
    %v948 = vsel %vm94, %v946, 0.0
    %949 = vadd.xlane.f32.xlu0 %v948
    %v950 = vpop.xlane.xlu0 %949
    %v951 = vmul.f32 %v950, %v98
    %v952 = vsub.f32 %v942, %v951
    %v953 = vmul.f32 %v952, %v952
    %955 = vrot.lane.b32.xlu0 %v953, 32
    %v956 = vpop.permute.xlu0 %955
    %v958 = vsel %vm94, %v956, 0.0
    %959 = vadd.xlane.f32.xlu0 %v958
    %v960 = vpop.xlane.xlu0 %959
    %v961 = vmul.f32 %v960, %v98
    %v962 = vadd.f32 %v961, 1e-05
    %v963 = vrsqrt.pop %v962
    %v964 = vmul.f32 %v952, %v963
    %v965 = vsel %vm94, %v943, 0.0
    %966 = vadd.xlane.f32.xlu0 %v965
    %v967 = vpop.xlane.xlu0 %966
    %v968 = vmul.f32 %v967, %v98
    %v969 = vsub.f32 %v943, %v968
    %v970 = vmul.f32 %v969, %v969
    %v971 = vsel %vm94, %v970, 0.0
    %972 = vadd.xlane.f32.xlu0 %v971
    %v973 = vpop.xlane.xlu0 %972
    %v974 = vmul.f32 %v973, %v98
    %v975 = vadd.f32 %v974, 1e-05
    %v976 = vrsqrt.pop %v975
    %v977 = vmul.f32 %v969, %v976
    %979 = vrot.lane.b32.xlu0 %v943, 96
    %v980 = vpop.permute.xlu0 %979
    %v982 = vsel %vm94, %v980, 0.0
    %983 = vadd.xlane.f32.xlu0 %v982
    %v984 = vpop.xlane.xlu0 %983
    %v985 = vmul.f32 %v984, %v98
    %v986 = vsub.f32 %v943, %v985
    %v987 = vmul.f32 %v986, %v986
    %989 = vrot.lane.b32.xlu0 %v987, 96
    %v990 = vpop.permute.xlu0 %989
    %v992 = vsel %vm94, %v990, 0.0
    %993 = vadd.xlane.f32.xlu0 %v992
    %v994 = vpop.xlane.xlu0 %993
    %v995 = vmul.f32 %v994, %v98
    %v996 = vadd.f32 %v995, 1e-05
    %v997 = vrsqrt.pop %v996
    %v998 = vmul.f32 %v986, %v997
    %1000 = vrot.lane.b32.xlu0 %v964, 32
    %v1001 = vpop.permute.xlu0 %1000
    %1004 = vrot.lane.b32.xlu0 %v977, 32
    %v1005 = vpop.permute.xlu0 %1004
    %1008 = vrot.lane.b32.xlu0 %v998, 32
    %v1009 = vpop.permute.xlu0 %1008
    %v1011 = vsel %vm94, %v1001, %v1005
    %v1012 = vsel %vm151, %v1011, %v1009
    %v1013 = vlaneseq
    %v1014 = vshrl.u32 %v1013, 7
    %v1015 = vsub.s32 6, %v1014
    %v1016 = vrot.slane %v88, %v1015
    %v1017 = vmul.f32 %v1012, %v1016
    %v1018 = vlaneseq
    %v1019 = vshrl.u32 %v1018, 7
    %v1020 = vsub.s32 7, %v1019
    %v1021 = vrot.slane %v88, %v1020
    %v1022 = vadd.f32 %v1017, %v1021
    %v1023 = vld [vmem:[%s7] sm:$0xff]
    %v1024 = vld [vmem:[%s7 + $0x8] sm:$0xff]
    %v1025 = vld [vmem:[%s7 + $0x10] sm:$0xff]
    %v1026 = vld [vmem:[%s7 + $0x18] sm:$0xff]
    %v1027 = vld [vmem:[%s7 + $0x20] sm:$0xff]
    %v1028 = vld [vmem:[%s7 + $0x28] sm:$0xff]
    %v1029 = vld [vmem:[%s7 + $0x30] sm:$0xff]
    %v1030 = vld [vmem:[%s7 + $0x38] sm:$0xff]
    %v1031 = vld [vmem:[%s7 + $0x40] sm:$0xff]
    %v1032 = vld [vmem:[%s7 + $0x48] sm:$0xff]
    %v1033 = vld [vmem:[%s7 + $0x50] sm:$0xff]
    %v1034 = vld [vmem:[%s7 + $0x58] sm:$0xff]
    %v1035 = vlaneseq
    %v1036 = vshrl.u32 %v1035, 7
    %v1037 = vsub.s32 0, %v1036
    %v1038 = vrot.slane %v89, %v1037
    %v1040 = vsel %vm179, %v1022, 0
    %1042 = vmatprep.subr.mxu0 0.0
    %1043 = vmatpush1.msra.mxu0 0.0
    %1044 = vmatprep.subr.mxu0 0.0
    %1045 = vmatpush1.msra.mxu0 0.0
    %1046 = vmatprep.subr.mxu0 0.0
    %1047 = vmatpush1.msra.mxu0 0.0
    %1048 = vmatprep.subr.mxu0 0.0
    %1049 = vmatpush1.msra.mxu0 0.0
    %1050 = vmatprep.subr.mxu0 0.0
    %1051 = vmatpush1.msra.mxu0 %v1034
    %1052 = vmatprep.subr.mxu0 0.0
    %1053 = vmatpush1.msra.mxu0 %v1033
    %1054 = vmatprep.subr.mxu0 0.0
    %1055 = vmatpush1.msra.mxu0 %v1032
    %1056 = vmatprep.subr.mxu0 0.0
    %1057 = vmatpush1.msra.mxu0 %v1031
    %1058 = vmatprep.subr.mxu0 0.0
    %1059 = vmatpush1.msra.mxu0 %v1030
    %1060 = vmatprep.subr.mxu0 0.0
    %1061 = vmatpush1.msra.mxu0 %v1029
    %1062 = vmatprep.subr.mxu0 0.0
    %1063 = vmatpush1.msra.mxu0 %v1028
    %1064 = vmatprep.subr.mxu0 0.0
    %1065 = vmatpush1.msra.mxu0 %v1027
    %1066 = vmatprep.subr.mxu0 0.0
    %1067 = vmatpush1.msra.mxu0 %v1026
    %1068 = vmatprep.subr.mxu0 0.0
    %1069 = vmatpush1.msra.mxu0 %v1025
    %1070 = vmatprep.subr.mxu0 0.0
    %1071 = vmatpush1.msra.mxu0 %v1024
    %1072 = vmatprep.subr.mxu0 0.0
    %1073 = vmatpush1.msra.mxu0 %v1023
    %1074 = vmatprep.subr.mxu0 0.0
    %1075 = vmatpush2.msra.mxu0 0.0
    %1076 = vmatprep.subr.mxu0 0.0
    %1077 = vmatpush2.msra.mxu0 0.0
    %1078 = vmatprep.subr.mxu0 0.0
    %1079 = vmatpush2.msra.mxu0 0.0
    %1080 = vmatprep.subr.mxu0 0.0
    %1081 = vmatpush2.msra.mxu0 0.0
    %1082 = vmatprep.subr.mxu0 0.0
    %1083 = vmatpush2.msra.mxu0 0.0
    %1084 = vmatprep.subr.mxu0 0.0
    %1085 = vmatpush2.msra.mxu0 0.0
    %1086 = vmatprep.subr.mxu0 0.0
    %1087 = vmatpush2.msra.mxu0 0.0
    %1088 = vmatprep.subr.mxu0 0.0
    %1089 = vmatpush2.msra.mxu0 0.0
    %1090 = vmatprep.subr.mxu0 0.0
    %1091 = vmatpush2.msra.mxu0 0.0
    %1092 = vmatprep.subr.mxu0 0.0
    %1093 = vmatpush2.msra.mxu0 0.0
    %1094 = vmatprep.subr.mxu0 0.0
    %1095 = vmatpush2.msra.mxu0 0.0
    %1096 = vmatprep.subr.mxu0 0.0
    %1097 = vmatpush2.msra.mxu0 0.0
    %1098 = vmatprep.subr.mxu0 0.0
    %1099 = vmatpush2.msra.mxu0 0.0
    %1100 = vmatprep.subr.mxu0 0.0
    %1101 = vmatpush2.msra.mxu0 0.0
    %1102 = vmatprep.subr.mxu0 0.0
    %1103 = vmatpush2.msra.mxu0 0.0
    %1104 = vmatprep.subr.mxu0 0.0
    %1105 = vmatpush2.msra.mxu0 0.0
    %1106 = vmatprep.mubr.f32.mxu0 0.0
    %1107 = vmatmul.mubr.f32.gmra.mxu0 %v1040
    %v1108 = vpop.f32.mrf.mxu0
    %v1109 = vadd.f32 %v1038, %v1108
    %v1110 = vpop.f32.mrf.mxu0
    %1111 = vdwg.mxu0
    %1112 = vrot.lane.b32.xlu0 %v943, 32
    %v1113 = vpop.permute.xlu0 %1112
    %v1114 = vsel %vm94, %v946, %v1113
    %1116 = vst.msk [vmem:[%s9] sm:$0xff] %vm179, %v1114
    %1118 = vrot.lane.b32.xlu0 %v1109, 96
    %v1119 = vpop.permute.xlu0 %1118
    %vm1121 = vcmask 1048320
    %1122 = vst.msk [vmem:[%s9] sm:$0xff] %vm1121, %v1119
    // Predicated region
    $region54: #{r_critic_all_forward.1} parent=1 // pred_check
      _
    $region55: #{r_critic_all_forward.1} parent=1 // pred_check_branch
      %1124 = sbr.rel (0) target = $region57
    $region56: #{r_critic_all_forward.1} parent=1 // pred_region
      _
    $region57: #{r_critic_all_forward.1} parent=1 // pred_fallthru
      _
    // Predicated region
    $region58: #{r_critic_all_forward.1} parent=1 // pred_check
      _
    $region59: #{r_critic_all_forward.1} parent=1 // pred_check_branch
      %1126 = sbr.rel (0) target = $region61
    $region60: #{r_critic_all_forward.1} parent=1 // pred_region
      _
    $region61: #{r_critic_all_forward.1} parent=1 // pred_fallthru
      _
    %1127 = vsyncpa [#allocation3], 1
    %1128 = vsyncpa [#allocation5], 1
    %1129 = vsyncpa [#allocation8], 1

</llo_original>
